<compile_context>
chip_gen: v6e
topology: v6e:2x2x1
jax: 0.10.0
libtpu: 0.0.40
codegen_flags: <defaults>
</compile_context>

<pallas_src>
import jax
import jax.numpy as jnp
from jax import lax
from jax.experimental import pallas as pl
from jax.experimental.pallas import tpu as pltpu


_MAX_TK = 2048  # max feature (K) tile for layer 1; bounds VMEM independent of D_in


def _make_kernel(d_in, tk):
    """Build the fused MLP-head kernel for a given (static) input dim / K tile."""
    ragged_k = (d_in % tk) != 0  # only possible in the large-D_in path

    def kernel(x_ref, w1_ref, b1_ref, w2_ref, b2_ref, w3_ref, b3_ref, o_ref, acc_ref):
        k = pl.program_id(1)
        nk = pl.num_programs(1)

        @pl.when(k == 0)
        def _():
            acc_ref[...] = jnp.zeros_like(acc_ref)

        xv = x_ref[...]
        if ragged_k:
            # Zero out-of-range feature columns of the last K tile so unspecified
            # pad data (possibly NaN) cannot pollute the accumulator.  w1 is
            # zero-padded to a K-tile multiple in prepare_params().
            col = k * tk + lax.broadcasted_iota(jnp.int32, xv.shape, 1)
            xv = jnp.where(col < d_in, xv, 0.0)

        # Layer 1 partial matmul: bf16 operands on the MXU, f32 accumulation.
        acc_ref[...] += jnp.dot(xv.astype(jnp.bfloat16), w1_ref[...],
                                preferred_element_type=jnp.float32)

        @pl.when(k == nk - 1)
        def _():
            # Layer 1 epilogue: bias + ReLU.  (Dropout = identity in eval mode.)
            h = jnp.maximum(acc_ref[...] + b1_ref[...], 0.0)

            # Layer 2: Linear + bias + ReLU.
            h = jnp.dot(h.astype(jnp.bfloat16), w2_ref[...],
                        preferred_element_type=jnp.float32)
            h = jnp.maximum(h + b2_ref[...], 0.0)

            # Output layer: logits, padded to a lane-dense 128 columns.
            out = jnp.dot(h.astype(jnp.bfloat16), w3_ref[...],
                          preferred_element_type=jnp.float32)
            o_ref[...] = (out + b3_ref[...]).astype(o_ref.dtype)

    return kernel


def prepare_params(params):
    """One-time weight prep (hoisted out of the forward pass).

    Casts matmul weights to bf16 and pads the final layer to 128 output lanes,
    so the Pallas kernel is the only per-call HBM consumer of the weights.
    """
    (w1, b1), (w2, b2), (w3, b3) = params
    D_in, H1 = w1.shape
    H2 = w2.shape[1]
    C = w3.shape[1]
    C_pad = 128 * pl.cdiv(C, 128)

    TK = D_in if D_in <= _MAX_TK else _MAX_TK
    D_pad = TK * pl.cdiv(D_in, TK)
    if D_pad != D_in:
        # Zero rows: out-of-range rows of the last w1 K-tile contribute nothing.
        w1 = jnp.pad(w1, ((0, D_pad - D_in), (0, 0)))

    w3p = jnp.pad(w3, ((0, 0), (0, C_pad - C)))
    b3p = jnp.pad(b3, ((0, 0), (0, C_pad - C)))

    return dict(
        w1=w1.astype(jnp.bfloat16), b1=b1,
        w2=w2.astype(jnp.bfloat16), b2=b2,
        w3=w3p.astype(jnp.bfloat16), b3=b3p,
        d_in=D_in, h1=H1, h2=H2, c=C, c_pad=C_pad, tk=TK,
    )


def _pick_batch_tile(B):
    if B <= 256:
        # Tiny batches: one tile, no 256-row padding waste.
        return 128 * pl.cdiv(B, 128)
    # Large batches: big tiles (up to 1024 rows) to amortize per-grid-step
    # overhead and MXU weight re-latching, but keep >= 2 grid steps so both
    # v7x TensorCores get work on the "parallel" batch axis.
    tb = 128 * pl.cdiv(pl.cdiv(B, 2), 128)
    return min(tb, 1024)


def _vmem_limit_bytes(TB, TK, H1, H2, C_pad):
    """Honest VMEM budget from the actual footprint (plus headroom)."""
    b = 0
    b += 2 * TB * TK * 4                   # x tile (f32), double-buffered
    b += 2 * TK * H1 * 2                   # w1 K-tile (bf16), double-buffered
    b += 2 * (H1 * H2 + H2 * C_pad) * 2    # w2, w3 (bf16), resident (2 bufs)
    b += 2 * (H1 + H2 + C_pad) * 4         # biases (f32, sublane-padded is tiny)
    b += 2 * TB * C_pad * 4                # output tile (f32), double-buffered
    b += TB * H1 * 4                       # f32 accumulator scratch
    b += TB * (H1 + H2) * (4 + 2)          # h/h2 temporaries (f32 + bf16 copies)
    b += TB * TK * 2                       # in-kernel bf16 copy of the x tile
    limit = int(b * 1.5) + (4 << 20)       # 50% headroom + 4 MiB slack
    return max(8 << 20, min(limit, 100 << 20))


def classification_head(x, prepared):
    """Fused MLP classification head.

    x        : (B, D_in) float32 — consumed directly (no wrapper pad/cast passes)
    prepared : output of prepare_params()
    returns logits (B, num_classes) float32
    """
    B, D_in = x.shape
    assert D_in == prepared["d_in"], (D_in, prepared["d_in"])
    H1, H2 = prepared["h1"], prepared["h2"]
    C, C_pad, TK = prepared["c"], prepared["c_pad"], prepared["tk"]

    TB = _pick_batch_tile(B)
    grid = (pl.cdiv(B, TB), pl.cdiv(D_in, TK))  # (batch "parallel", K "arbitrary" last)

    kernel = _make_kernel(D_in, TK)

    out = pl.pallas_call(
        kernel,
        out_shape=jax.ShapeDtypeStruct((B, C_pad), jnp.float32),
        grid=grid,
        in_specs=[
            pl.BlockSpec((TB, TK), lambda i, k: (i, k)),     # x: batch + feature tiled
            pl.BlockSpec((TK, H1), lambda i, k: (k, 0)),     # w1 K-tile
            pl.BlockSpec((1, H1), lambda i, k: (0, 0)),      # b1 (resident)
            pl.BlockSpec((H1, H2), lambda i, k: (0, 0)),     # w2 (resident)
            pl.BlockSpec((1, H2), lambda i, k: (0, 0)),      # b2 (resident)
            pl.BlockSpec((H2, C_pad), lambda i, k: (0, 0)),  # w3 (resident)
            pl.BlockSpec((1, C_pad), lambda i, k: (0, 0)),   # b3 (resident)
        ],
        out_specs=pl.BlockSpec((TB, C_pad), lambda i, k: (i, 0)),
        scratch_shapes=[pltpu.VMEM((TB, H1), jnp.float32)],  # layer-1 f32 accumulator
        compiler_params=pltpu.CompilerParams(
            dimension_semantics=("parallel", "arbitrary"),
            vmem_limit_bytes=_vmem_limit_bytes(TB, TK, H1, H2, C_pad),
        ),
    )(x, prepared["w1"], prepared["b1"], prepared["w2"], prepared["b2"],
      prepared["w3"], prepared["b3"])

    return out[:, :C]


def init_params(key, input_dim, hidden_dims, num_classes, dtype=jnp.float32):
    """Deterministic init mimicking nn.Linear's uniform(-1/sqrt(fan_in), 1/sqrt(fan_in))."""
    dims = [input_dim] + list(hidden_dims) + [num_classes]
    params = []
    for i in range(len(dims) - 1):
        fan_in, fan_out = dims[i], dims[i + 1]
        key, kw, kb = jax.random.split(key, 3)
        bound = 1.0 / (fan_in ** 0.5)
        w = jax.random.uniform(kw, (fan_in, fan_out), dtype, -bound, bound)
        b = jax.random.uniform(kb, (1, fan_out), dtype, -bound, bound)
        params.append((w, b))
    return params


def reference_forward(x, params):
    """Reference with the same precision policy: bf16 matmul operands, f32 accumulate."""
    h = x
    n = len(params)
    for i, (w, b) in enumerate(params):
        h = jnp.dot(h.astype(jnp.bfloat16), w.astype(jnp.bfloat16),
                    preferred_element_type=jnp.float32) + b
        if i < n - 1:
            h = jnp.maximum(h, 0.0)
    return h


if __name__ == "__main__":
    key = jax.random.PRNGKey(0)
    batch = 2
    input_dim = 32
    hidden_dims = [512, 256]
    num_classes = 11

    key, kx = jax.random.split(key)
    x = jax.random.normal(kx, (batch, input_dim), jnp.float32)

    params = init_params(key, input_dim, hidden_dims, num_classes)
    prepared = prepare_params(params)   # one-time weight prep (bf16 cast + lane padding)

    logits = classification_head(x, prepared)
    logits = jax.block_until_ready(logits)

    ref = reference_forward(x, params)
    assert logits.shape == (batch, num_classes), logits.shape
    assert jnp.allclose(logits, ref, atol=1e-3, rtol=1e-3), "mismatch vs reference"

    print("KERNEL_OK")
</pallas_src>

<mosaic_0001>
module attributes {stable_mosaic.version = 11 : i64} {
  func.func @kernel(%arg0: i32, %arg1: i32, %arg2: memref<128x32xf32, #tpu.memory_space<vmem>>, %arg3: memref<32x512xbf16, #tpu.memory_space<vmem>>, %arg4: memref<1x512xf32, #tpu.memory_space<vmem>>, %arg5: memref<512x256xbf16, #tpu.memory_space<vmem>>, %arg6: memref<1x256xf32, #tpu.memory_space<vmem>>, %arg7: memref<256x128xbf16, #tpu.memory_space<vmem>>, %arg8: memref<1x128xf32, #tpu.memory_space<vmem>>, %arg9: memref<128x128xf32, #tpu.memory_space<vmem>>, %arg10: memref<128x512xf32, #tpu.memory_space<vmem>>) attributes {dimension_semantics = [#tpu.dimension_semantics<parallel>, #tpu.dimension_semantics<arbitrary>], iteration_bounds = array<i64: 1, 1>, scalar_prefetch = 0 : i64, scratch_operands = 1 : i64, tpu.core_type = #tpu.core_type<tc>, window_params = [{transform_indices = @transform_0, window_bounds = array<i64: 128, 32>}, {transform_indices = @transform_1, window_bounds = array<i64: 32, 512>}, {pipeline_mode = #tpu.pipeline_mode<synchronous>, transform_indices = @transform_2, window_bounds = array<i64: 1, 512>}, {pipeline_mode = #tpu.pipeline_mode<synchronous>, transform_indices = @transform_3, window_bounds = array<i64: 512, 256>}, {pipeline_mode = #tpu.pipeline_mode<synchronous>, transform_indices = @transform_4, window_bounds = array<i64: 1, 256>}, {pipeline_mode = #tpu.pipeline_mode<synchronous>, transform_indices = @transform_5, window_bounds = array<i64: 256, 128>}, {pipeline_mode = #tpu.pipeline_mode<synchronous>, transform_indices = @transform_6, window_bounds = array<i64: 1, 128>}, {transform_indices = @transform_7, window_bounds = array<i64: 128, 128>}]} {
    %c0_i32 = arith.constant 0 : i32
    %0 = arith.cmpi eq, %arg1, %c0_i32 : i32
    %1 = arith.extui %0 : i1 to i32
    %c0_i32_0 = arith.constant 0 : i32
    %2 = arith.cmpi ne, %1, %c0_i32_0 : i32
    scf.if %2 {
      %cst_10 = arith.constant 0.000000e+00 : f32
      %13 = vector.broadcast %cst_10 : f32 to vector<128x512xf32>
      %c0_11 = arith.constant 0 : index
      %c0_12 = arith.constant 0 : index
      %14 = vector.load %arg10[%c0_11, %c0_12] : memref<128x512xf32, #tpu.memory_space<vmem>>, vector<128x512xf32>
      tpu.vector_store %arg10[%c0_11, %c0_12], %13 {strides = array<i32>} : memref<128x512xf32, #tpu.memory_space<vmem>>, vector<128x512xf32>,
    } else {
    }
    %c0 = arith.constant 0 : index
    %c0_1 = arith.constant 0 : index
    %3 = vector.load %arg2[%c0, %c0_1] : memref<128x32xf32, #tpu.memory_space<vmem>>, vector<128x32xf32>
    %c0_2 = arith.constant 0 : index
    %c0_3 = arith.constant 0 : index
    %4 = vector.load %arg10[%c0_2, %c0_3] : memref<128x512xf32, #tpu.memory_space<vmem>>, vector<128x512xf32>
    %5 = arith.truncf %3 : vector<128x32xf32> to vector<128x32xbf16>
    %c0_4 = arith.constant 0 : index
    %c0_5 = arith.constant 0 : index
    %6 = vector.load %arg3[%c0_4, %c0_5] : memref<32x512xbf16, #tpu.memory_space<vmem>>, vector<32x512xbf16>
    %cst = arith.constant dense<0.000000e+00> : vector<128x512xf32>
    %7 = tpu.matmul %5, %6, %cst {dimension_numbers = #tpu.dot_dimension_numbers<[1], [0], [0], [1], [0, 0, 1, 1], [], []>} : vector<128x32xbf16>, vector<32x512xbf16>, vector<128x512xf32> -> vector<128x512xf32>
    %8 = arith.addf %4, %7 : vector<128x512xf32>
    %c0_6 = arith.constant 0 : index
    %c0_7 = arith.constant 0 : index
    %9 = vector.load %arg10[%c0_6, %c0_7] : memref<128x512xf32, #tpu.memory_space<vmem>>, vector<128x512xf32>
    tpu.vector_store %arg10[%c0_6, %c0_7], %8 {strides = array<i32>} : memref<128x512xf32, #tpu.memory_space<vmem>>, vector<128x512xf32>,
    %c0_i32_8 = arith.constant 0 : i32
    %10 = arith.cmpi eq, %arg1, %c0_i32_8 : i32
    %11 = arith.extui %10 : i1 to i32
    %c0_i32_9 = arith.constant 0 : i32
    %12 = arith.cmpi ne, %11, %c0_i32_9 : i32
    scf.if %12 {
      %c0_10 = arith.constant 0 : index
      %c0_11 = arith.constant 0 : index
      %13 = vector.load %arg10[%c0_10, %c0_11] : memref<128x512xf32, #tpu.memory_space<vmem>>, vector<128x512xf32>
      %c0_12 = arith.constant 0 : index
      %c0_13 = arith.constant 0 : index
      %14 = vector.load %arg4[%c0_12, %c0_13] : memref<1x512xf32, #tpu.memory_space<vmem>>, vector<1x512xf32>
      %15 = vector.broadcast %14 : vector<1x512xf32> to vector<128x512xf32>
      %16 = arith.addf %13, %15 : vector<128x512xf32>
      %cst_14 = arith.constant 0.000000e+00 : f32
      %17 = vector.broadcast %cst_14 : f32 to vector<128x512xf32>
      %18 = arith.maximumf %16, %17 : vector<128x512xf32>
      %19 = arith.truncf %18 : vector<128x512xf32> to vector<128x512xbf16>
      %c0_15 = arith.constant 0 : index
      %c0_16 = arith.constant 0 : index
      %20 = vector.load %arg5[%c0_15, %c0_16] : memref<512x256xbf16, #tpu.memory_space<vmem>>, vector<512x256xbf16>
      %cst_17 = arith.constant dense<0.000000e+00> : vector<128x256xf32>
      %21 = tpu.matmul %19, %20, %cst_17 {dimension_numbers = #tpu.dot_dimension_numbers<[1], [0], [0], [1], [0, 0, 1, 1], [], []>} : vector<128x512xbf16>, vector<512x256xbf16>, vector<128x256xf32> -> vector<128x256xf32>
      %c0_18 = arith.constant 0 : index
      %c0_19 = arith.constant 0 : index
      %22 = vector.load %arg6[%c0_18, %c0_19] : memref<1x256xf32, #tpu.memory_space<vmem>>, vector<1x256xf32>
      %23 = vector.broadcast %22 : vector<1x256xf32> to vector<128x256xf32>
      %24 = arith.addf %21, %23 : vector<128x256xf32>
      %cst_20 = arith.constant 0.000000e+00 : f32
      %25 = vector.broadcast %cst_20 : f32 to vector<128x256xf32>
      %26 = arith.maximumf %24, %25 : vector<128x256xf32>
      %27 = arith.truncf %26 : vector<128x256xf32> to vector<128x256xbf16>
      %c0_21 = arith.constant 0 : index
      %c0_22 = arith.constant 0 : index
      %28 = vector.load %arg7[%c0_21, %c0_22] : memref<256x128xbf16, #tpu.memory_space<vmem>>, vector<256x128xbf16>
      %cst_23 = arith.constant dense<0.000000e+00> : vector<128x128xf32>
      %29 = tpu.matmul %27, %28, %cst_23 {dimension_numbers = #tpu.dot_dimension_numbers<[1], [0], [0], [1], [0, 0, 1, 1], [], []>} : vector<128x256xbf16>, vector<256x128xbf16>, vector<128x128xf32> -> vector<128x128xf32>
      %c0_24 = arith.constant 0 : index
      %c0_25 = arith.constant 0 : index
      %30 = vector.load %arg8[%c0_24, %c0_25] : memref<1x128xf32, #tpu.memory_space<vmem>>, vector<1x128xf32>
      %31 = vector.broadcast %30 : vector<1x128xf32> to vector<128x128xf32>
      %32 = arith.addf %29, %31 : vector<128x128xf32>
      %c0_26 = arith.constant 0 : index
      %c0_27 = arith.constant 0 : index
      %33 = vector.load %arg9[%c0_26, %c0_27] : memref<128x128xf32, #tpu.memory_space<vmem>>, vector<128x128xf32>
      tpu.vector_store %arg9[%c0_26, %c0_27], %32 {strides = array<i32>} : memref<128x128xf32, #tpu.memory_space<vmem>>, vector<128x128xf32>,
    } else {
    }
    return
  }
  func.func @transform_0(%arg0: i32, %arg1: i32) -> (i32, i32) {
    %c0_i32 = arith.constant 0 : i32
    return %arg0, %arg1 : i32, i32
  }
  func.func @transform_1(%arg0: i32, %arg1: i32) -> (i32, i32) {
    %c0_i32 = arith.constant 0 : i32
    %c0_i32_0 = arith.constant 0 : i32
    return %arg1, %c0_i32 : i32, i32
  }
  func.func @transform_2(%arg0: i32, %arg1: i32) -> (i32, i32) {
    %c0_i32 = arith.constant 0 : i32
    %c0_i32_0 = arith.constant 0 : i32
    %c0_i32_1 = arith.constant 0 : i32
    return %c0_i32, %c0_i32_0 : i32, i32
  }
  func.func @transform_3(%arg0: i32, %arg1: i32) -> (i32, i32) {
    %c0_i32 = arith.constant 0 : i32
    %c0_i32_0 = arith.constant 0 : i32
    %c0_i32_1 = arith.constant 0 : i32
    return %c0_i32, %c0_i32_0 : i32, i32
  }
  func.func @transform_4(%arg0: i32, %arg1: i32) -> (i32, i32) {
    %c0_i32 = arith.constant 0 : i32
    %c0_i32_0 = arith.constant 0 : i32
    %c0_i32_1 = arith.constant 0 : i32
    return %c0_i32, %c0_i32_0 : i32, i32
  }
  func.func @transform_5(%arg0: i32, %arg1: i32) -> (i32, i32) {
    %c0_i32 = arith.constant 0 : i32
    %c0_i32_0 = arith.constant 0 : i32
    %c0_i32_1 = arith.constant 0 : i32
    return %c0_i32, %c0_i32_0 : i32, i32
  }
  func.func @transform_6(%arg0: i32, %arg1: i32) -> (i32, i32) {
    %c0_i32 = arith.constant 0 : i32
    %c0_i32_0 = arith.constant 0 : i32
    %c0_i32_1 = arith.constant 0 : i32
    return %c0_i32, %c0_i32_0 : i32, i32
  }
  func.func @transform_7(%arg0: i32, %arg1: i32) -> (i32, i32) {
    %c0_i32 = arith.constant 0 : i32
    %c0_i32_0 = arith.constant 0 : i32
    return %arg0, %c0_i32 : i32, i32
  }
}

</mosaic_0001>

<llo_original>
// kernel: tpu_custom_call.1
$region0: #{tpu_custom_call.1}
  #allocation0 [shape = 'u32[]', space=smem, size = 0x4, offset = 0x4, fixed_abs, tag = 'smem constant byte address 0x4 - core index']
  #allocation1 [shape = 'u32[144,128]{1,0:T(1,128)}', space=vmem, size = 0x12000, scoped, tag = 'internal scratch']
  #allocation2 [shape = 'f32[128,512]{1,0:T(8,128)}', space=vmem, size = 0x40000, scoped, tag = 'scratch operand']
  %s0 = inlined_call_operand.hbm [shape: f32[2,32], index: 0, kind: input, shape index: {}]
  %s1 = inlined_call_operand.hbm [shape: bf16[32,512], index: 1, kind: input, shape index: {}]
  %s2 = inlined_call_operand.hbm [shape: f32[1,512], index: 2, kind: input, shape index: {}]
  %s3 = inlined_call_operand.hbm [shape: bf16[512,256], index: 3, kind: input, shape index: {}]
  %s4 = inlined_call_operand.vmem [shape: f32[1,256], index: 4, kind: input, shape index: {}]
  %s5 = inlined_call_operand.hbm [shape: bf16[256,128], index: 5, kind: input, shape index: {}]
  %s6 = inlined_call_operand.vmem [shape: f32[1,128], index: 6, kind: input, shape index: {}]
  %s7 = inlined_call_operand.hbm [shape: f32[2,128], index: 7, kind: output, shape index: {}]
  %s8 = sld [smem:[#allocation0]]
  $region66: #{tpu_custom_call.1} parent=0
    _
  %s10 = ssub.s32 1, %s8
  %s11 = scalar_select 0, %s10, %s8
  $region1: #{tpu_custom_call.1} parent=0
    #allocation3 [shape = 'u8[65536]{0}', space=vmem, size = 0x10000, scoped, tag = 'input window, operand 0, single buffered']
    #allocation4 [shape = 's32[1]{0}', space=sflag, size = 0x4, scoped, tag = 'scoped memory for tpu_custom_call.1']
    #allocation5 [shape = 's32[1]{0}', space=sflag, size = 0x4, scoped, tag = 'scoped memory for tpu_custom_call.1']
    #allocation6 [shape = 'u8[32768]{0}', space=vmem, size = 0x8000, scoped, tag = 'input window, operand 1, single buffered']
    #allocation7 [shape = 's32[1]{0}', space=sflag, size = 0x4, scoped, tag = 'scoped memory for tpu_custom_call.1']
    #allocation8 [shape = 'u8[2048]{0}', space=vmem, size = 0x800, scoped, tag = 'input window, operand 2, single buffered']
    #allocation9 [shape = 'u8[262144]{0}', space=vmem, size = 0x40000, scoped, tag = 'input window, operand 3, single buffered']
    #allocation10 [shape = 's32[1]{0}', space=sflag, size = 0x4, scoped, tag = 'scoped memory for tpu_custom_call.1']
    #allocation11 [shape = 'u8[65536]{0}', space=vmem, size = 0x10000, scoped, tag = 'input window, operand 5, single buffered']
    #allocation12 [shape = 'u8[65536]{0}', space=vmem, size = 0x10000, scoped, tag = 'output window, operand 0, single buffered']
    %12 = vsyncpa [#allocation4], 0
    %13 = vsyncpa [#allocation7], 0
    %14 = vsyncpa [#allocation10], 0
    %15 = vsyncpa [#allocation5], 0
    // Predicated region
    $region2: #{tpu_custom_call.1} parent=1 // pred_check
      _
    $region3: #{tpu_custom_call.1} parent=1 // pred_check_branch
      %17 = sbr.rel (0) target = $region5
    $region4: #{tpu_custom_call.1} parent=1 // pred_region
      %s19 = ssub.s32 2048, 32
      %20 = vsyncadd [#allocation4], %s19
      %s21 = sshll.u32 [#allocation3], 4
      %s22 = int_to_ptr.vmem [resolvable:$true] %s21
      %27 = dma.hbm_to_vmem [thread:$0]  %s0, 32, %s22, [#allocation4], 32, 32, 2
    $region5: #{tpu_custom_call.1} parent=1 // pred_fallthru
      _
    // Predicated region
    $region6: #{tpu_custom_call.1} parent=1 // pred_check
      _
    $region7: #{tpu_custom_call.1} parent=1 // pred_check_branch
      %29 = sbr.rel (0) target = $region9
    $region8: #{tpu_custom_call.1} parent=1 // pred_region
      %s31 = ssub.s32 1024, 1024
      %32 = vsyncadd [#allocation7], %s31
      %s33 = sshll.u32 [#allocation6], 4
      %s34 = int_to_ptr.vmem [resolvable:$true] %s33
      %39 = dma.hbm_to_vmem [thread:$0]  %s1, 1024, %s34, [#allocation7], 256, 256, 16
    $region9: #{tpu_custom_call.1} parent=1 // pred_fallthru
      _
    // Predicated region
    $region10: #{tpu_custom_call.1} parent=1 // pred_check
      _
    $region11: #{tpu_custom_call.1} parent=1 // pred_check_branch
      %41 = sbr.rel (0) target = $region13
    $region12: #{tpu_custom_call.1} parent=1 // pred_region
      %s43 = ssub.s32 64, 64
      %44 = vsyncadd [#allocation7], %s43
      %s46 = sshll.u32 [#allocation8], 4
      %s47 = int_to_ptr.vmem [resolvable:$true] %s46
      %49 = dma.hbm_to_vmem [thread:$0]  %s2, 64, %s47, [#allocation7]
    $region13: #{tpu_custom_call.1} parent=1 // pred_fallthru
      _
    // Predicated region
    $region14: #{tpu_custom_call.1} parent=1 // pred_check
      _
    $region15: #{tpu_custom_call.1} parent=1 // pred_check_branch
      %51 = sbr.rel (0) target = $region17
    $region16: #{tpu_custom_call.1} parent=1 // pred_region
      %s53 = ssub.s32 8192, 8192
      %54 = vsyncadd [#allocation10], %s53
      %s55 = sshll.u32 [#allocation9], 4
      %s56 = int_to_ptr.vmem [resolvable:$true] %s55
      %61 = dma.hbm_to_vmem [thread:$0]  %s3, 8192, %s56, [#allocation10], 128, 128, 8
    $region17: #{tpu_custom_call.1} parent=1 // pred_fallthru
      _
    // Predicated region
    $region18: #{tpu_custom_call.1} parent=1 // pred_check
      _
    $region19: #{tpu_custom_call.1} parent=1 // pred_check_branch
      %63 = sbr.rel (0) target = $region21
    $region20: #{tpu_custom_call.1} parent=1 // pred_region
      _
    $region21: #{tpu_custom_call.1} parent=1 // pred_fallthru
      _
    // Predicated region
    $region22: #{tpu_custom_call.1} parent=1 // pred_check
      _
    $region23: #{tpu_custom_call.1} parent=1 // pred_check_branch
      %65 = sbr.rel (0) target = $region25
    $region24: #{tpu_custom_call.1} parent=1 // pred_region
      %s67 = ssub.s32 2048, 2048
      %68 = vsyncadd [#allocation10], %s67
      %s69 = sshll.u32 [#allocation11], 4
      %s70 = int_to_ptr.vmem [resolvable:$true] %s69
      %75 = dma.hbm_to_vmem [thread:$0]  %s5, 2048, %s70, [#allocation10], 64, 64, 4
    $region25: #{tpu_custom_call.1} parent=1 // pred_fallthru
      _
    // Predicated region
    $region26: #{tpu_custom_call.1} parent=1 // pred_check
      _
    $region27: #{tpu_custom_call.1} parent=1 // pred_check_branch
      %77 = sbr.rel (0) target = $region29
    $region28: #{tpu_custom_call.1} parent=1 // pred_region
      _
    $region29: #{tpu_custom_call.1} parent=1 // pred_fallthru
      _
    // Predicated region
    $region30: #{tpu_custom_call.1} parent=1 // pred_check
      _
    $region31: #{tpu_custom_call.1} parent=1 // pred_check_branch
      %79 = sbr.rel (0) target = $region33
    $region32: #{tpu_custom_call.1} parent=1 // pred_region
      %80 = dma.done [#allocation4], 2048
    $region33: #{tpu_custom_call.1} parent=1 // pred_fallthru
      _
    // Predicated region
    $region34: #{tpu_custom_call.1} parent=1 // pred_check
      _
    $region35: #{tpu_custom_call.1} parent=1 // pred_check_branch
      %82 = sbr.rel (0) target = $region37
    $region36: #{tpu_custom_call.1} parent=1 // pred_region
      %83 = dma.done [#allocation7], 1024
    $region37: #{tpu_custom_call.1} parent=1 // pred_fallthru
      _
    // Predicated region
    $region38: #{tpu_custom_call.1} parent=1 // pred_check
      _
    $region39: #{tpu_custom_call.1} parent=1 // pred_check_branch
      %85 = sbr.rel (0) target = $region41
    $region40: #{tpu_custom_call.1} parent=1 // pred_region
      %86 = dma.done [#allocation7], 64
    $region41: #{tpu_custom_call.1} parent=1 // pred_fallthru
      _
    // Predicated region
    $region42: #{tpu_custom_call.1} parent=1 // pred_check
      _
    $region43: #{tpu_custom_call.1} parent=1 // pred_check_branch
      %88 = sbr.rel (0) target = $region45
    $region44: #{tpu_custom_call.1} parent=1 // pred_region
      %89 = dma.done [#allocation10], 8192
    $region45: #{tpu_custom_call.1} parent=1 // pred_fallthru
      _
    // Predicated region
    $region46: #{tpu_custom_call.1} parent=1 // pred_check
      _
    $region47: #{tpu_custom_call.1} parent=1 // pred_check_branch
      %91 = sbr.rel (0) target = $region49
    $region48: #{tpu_custom_call.1} parent=1 // pred_region
      %92 = dma.done [#allocation10], 2048
    $region49: #{tpu_custom_call.1} parent=1 // pred_fallthru
      _
    %p94 = scmp.eq.s32.totalorder 0, 0
    // Predicated region
    $region50: #{tpu_custom_call.1} parent=1 // pred_check
      %p95 = pneg %p94
    $region51: #{tpu_custom_call.1} parent=1 // pred_check_branch
      %97 = sbr.rel (%p95) target = $region53
    $region52: #{tpu_custom_call.1} parent=1 // pred_region
      %98 = vst [vmem:[#allocation2] sm:$0xff] 0.0
      %99 = vst [vmem:[#allocation2 + $0x8] sm:$0xff] 0.0
      %100 = vst [vmem:[#allocation2 + $0x10] sm:$0xff] 0.0
      %101 = vst [vmem:[#allocation2 + $0x18] sm:$0xff] 0.0
      %102 = vst [vmem:[#allocation2 + $0x20] sm:$0xff] 0.0
      %103 = vst [vmem:[#allocation2 + $0x28] sm:$0xff] 0.0
      %104 = vst [vmem:[#allocation2 + $0x30] sm:$0xff] 0.0
      %105 = vst [vmem:[#allocation2 + $0x38] sm:$0xff] 0.0
      %106 = vst [vmem:[#allocation2 + $0x40] sm:$0xff] 0.0
      %107 = vst [vmem:[#allocation2 + $0x48] sm:$0xff] 0.0
      %108 = vst [vmem:[#allocation2 + $0x50] sm:$0xff] 0.0
      %109 = vst [vmem:[#allocation2 + $0x58] sm:$0xff] 0.0
      %110 = vst [vmem:[#allocation2 + $0x60] sm:$0xff] 0.0
      %111 = vst [vmem:[#allocation2 + $0x68] sm:$0xff] 0.0
      %112 = vst [vmem:[#allocation2 + $0x70] sm:$0xff] 0.0
      %113 = vst [vmem:[#allocation2 + $0x78] sm:$0xff] 0.0
      %114 = vst [vmem:[#allocation2 + $0x80] sm:$0xff] 0.0
      %115 = vst [vmem:[#allocation2 + $0x88] sm:$0xff] 0.0
      %116 = vst [vmem:[#allocation2 + $0x90] sm:$0xff] 0.0
      %117 = vst [vmem:[#allocation2 + $0x98] sm:$0xff] 0.0
      %118 = vst [vmem:[#allocation2 + $0xa0] sm:$0xff] 0.0
      %119 = vst [vmem:[#allocation2 + $0xa8] sm:$0xff] 0.0
      %120 = vst [vmem:[#allocation2 + $0xb0] sm:$0xff] 0.0
      %121 = vst [vmem:[#allocation2 + $0xb8] sm:$0xff] 0.0
      %122 = vst [vmem:[#allocation2 + $0xc0] sm:$0xff] 0.0
      %123 = vst [vmem:[#allocation2 + $0xc8] sm:$0xff] 0.0
      %124 = vst [vmem:[#allocation2 + $0xd0] sm:$0xff] 0.0
      %125 = vst [vmem:[#allocation2 + $0xd8] sm:$0xff] 0.0
      %126 = vst [vmem:[#allocation2 + $0xe0] sm:$0xff] 0.0
      %127 = vst [vmem:[#allocation2 + $0xe8] sm:$0xff] 0.0
      %128 = vst [vmem:[#allocation2 + $0xf0] sm:$0xff] 0.0
      %129 = vst [vmem:[#allocation2 + $0xf8] sm:$0xff] 0.0
      %130 = vst [vmem:[#allocation2 + $0x100] sm:$0xff] 0.0
      %131 = vst [vmem:[#allocation2 + $0x108] sm:$0xff] 0.0
      %132 = vst [vmem:[#allocation2 + $0x110] sm:$0xff] 0.0
      %133 = vst [vmem:[#allocation2 + $0x118] sm:$0xff] 0.0
      %134 = vst [vmem:[#allocation2 + $0x120] sm:$0xff] 0.0
      %135 = vst [vmem:[#allocation2 + $0x128] sm:$0xff] 0.0
      %136 = vst [vmem:[#allocation2 + $0x130] sm:$0xff] 0.0
      %137 = vst [vmem:[#allocation2 + $0x138] sm:$0xff] 0.0
      %138 = vst [vmem:[#allocation2 + $0x140] sm:$0xff] 0.0
      %139 = vst [vmem:[#allocation2 + $0x148] sm:$0xff] 0.0
      %140 = vst [vmem:[#allocation2 + $0x150] sm:$0xff] 0.0
      %141 = vst [vmem:[#allocation2 + $0x158] sm:$0xff] 0.0
      %142 = vst [vmem:[#allocation2 + $0x160] sm:$0xff] 0.0
      %143 = vst [vmem:[#allocation2 + $0x168] sm:$0xff] 0.0
      %144 = vst [vmem:[#allocation2 + $0x170] sm:$0xff] 0.0
      %145 = vst [vmem:[#allocation2 + $0x178] sm:$0xff] 0.0
      %146 = vst [vmem:[#allocation2 + $0x180] sm:$0xff] 0.0
      %147 = vst [vmem:[#allocation2 + $0x188] sm:$0xff] 0.0
      %148 = vst [vmem:[#allocation2 + $0x190] sm:$0xff] 0.0
      %149 = vst [vmem:[#allocation2 + $0x198] sm:$0xff] 0.0
      %150 = vst [vmem:[#allocation2 + $0x1a0] sm:$0xff] 0.0
      %151 = vst [vmem:[#allocation2 + $0x1a8] sm:$0xff] 0.0
      %152 = vst [vmem:[#allocation2 + $0x1b0] sm:$0xff] 0.0
      %153 = vst [vmem:[#allocation2 + $0x1b8] sm:$0xff] 0.0
      %154 = vst [vmem:[#allocation2 + $0x1c0] sm:$0xff] 0.0
      %155 = vst [vmem:[#allocation2 + $0x1c8] sm:$0xff] 0.0
      %156 = vst [vmem:[#allocation2 + $0x1d0] sm:$0xff] 0.0
      %157 = vst [vmem:[#allocation2 + $0x1d8] sm:$0xff] 0.0
      %158 = vst [vmem:[#allocation2 + $0x1e0] sm:$0xff] 0.0
      %159 = vst [vmem:[#allocation2 + $0x1e8] sm:$0xff] 0.0
      %160 = vst [vmem:[#allocation2 + $0x1f0] sm:$0xff] 0.0
      %161 = vst [vmem:[#allocation2 + $0x1f8] sm:$0xff] 0.0
    $region53: #{tpu_custom_call.1} parent=1 // pred_fallthru
      _
    %v162 = vld [vmem:[#allocation3] sm:$0xff]
    %v163 = vld [vmem:[#allocation3 + $0x8] sm:$0xff]
    %v164 = vld [vmem:[#allocation3 + $0x10] sm:$0xff]
    %v165 = vld [vmem:[#allocation3 + $0x18] sm:$0xff]
    %v166 = vld [vmem:[#allocation3 + $0x20] sm:$0xff]
    %v167 = vld [vmem:[#allocation3 + $0x28] sm:$0xff]
    %v168 = vld [vmem:[#allocation3 + $0x30] sm:$0xff]
    %v169 = vld [vmem:[#allocation3 + $0x38] sm:$0xff]
    %v170 = vld [vmem:[#allocation3 + $0x40] sm:$0xff]
    %v171 = vld [vmem:[#allocation3 + $0x48] sm:$0xff]
    %v172 = vld [vmem:[#allocation3 + $0x50] sm:$0xff]
    %v173 = vld [vmem:[#allocation3 + $0x58] sm:$0xff]
    %v174 = vld [vmem:[#allocation3 + $0x60] sm:$0xff]
    %v175 = vld [vmem:[#allocation3 + $0x68] sm:$0xff]
    %v176 = vld [vmem:[#allocation3 + $0x70] sm:$0xff]
    %v177 = vld [vmem:[#allocation3 + $0x78] sm:$0xff]
    %v178 = vld [vmem:[#allocation2] sm:$0xff]
    %v179 = vld [vmem:[#allocation2 + $0x8] sm:$0xff]
    %v180 = vld [vmem:[#allocation2 + $0x10] sm:$0xff]
    %v181 = vld [vmem:[#allocation2 + $0x18] sm:$0xff]
    %v182 = vld [vmem:[#allocation2 + $0x20] sm:$0xff]
    %v183 = vld [vmem:[#allocation2 + $0x28] sm:$0xff]
    %v184 = vld [vmem:[#allocation2 + $0x30] sm:$0xff]
    %v185 = vld [vmem:[#allocation2 + $0x38] sm:$0xff]
    %v186 = vld [vmem:[#allocation2 + $0x40] sm:$0xff]
    %v187 = vld [vmem:[#allocation2 + $0x48] sm:$0xff]
    %v188 = vld [vmem:[#allocation2 + $0x50] sm:$0xff]
    %v189 = vld [vmem:[#allocation2 + $0x58] sm:$0xff]
    %v190 = vld [vmem:[#allocation2 + $0x60] sm:$0xff]
    %v191 = vld [vmem:[#allocation2 + $0x68] sm:$0xff]
    %v192 = vld [vmem:[#allocation2 + $0x70] sm:$0xff]
    %v193 = vld [vmem:[#allocation2 + $0x78] sm:$0xff]
    %v194 = vld [vmem:[#allocation2 + $0x80] sm:$0xff]
    %v195 = vld [vmem:[#allocation2 + $0x88] sm:$0xff]
    %v196 = vld [vmem:[#allocation2 + $0x90] sm:$0xff]
    %v197 = vld [vmem:[#allocation2 + $0x98] sm:$0xff]
    %v198 = vld [vmem:[#allocation2 + $0xa0] sm:$0xff]
    %v199 = vld [vmem:[#allocation2 + $0xa8] sm:$0xff]
    %v200 = vld [vmem:[#allocation2 + $0xb0] sm:$0xff]
    %v201 = vld [vmem:[#allocation2 + $0xb8] sm:$0xff]
    %v202 = vld [vmem:[#allocation2 + $0xc0] sm:$0xff]
    %v203 = vld [vmem:[#allocation2 + $0xc8] sm:$0xff]
    %v204 = vld [vmem:[#allocation2 + $0xd0] sm:$0xff]
    %v205 = vld [vmem:[#allocation2 + $0xd8] sm:$0xff]
    %v206 = vld [vmem:[#allocation2 + $0xe0] sm:$0xff]
    %v207 = vld [vmem:[#allocation2 + $0xe8] sm:$0xff]
    %v208 = vld [vmem:[#allocation2 + $0xf0] sm:$0xff]
    %v209 = vld [vmem:[#allocation2 + $0xf8] sm:$0xff]
    %v210 = vld [vmem:[#allocation2 + $0x100] sm:$0xff]
    %v211 = vld [vmem:[#allocation2 + $0x108] sm:$0xff]
    %v212 = vld [vmem:[#allocation2 + $0x110] sm:$0xff]
    %v213 = vld [vmem:[#allocation2 + $0x118] sm:$0xff]
    %v214 = vld [vmem:[#allocation2 + $0x120] sm:$0xff]
    %v215 = vld [vmem:[#allocation2 + $0x128] sm:$0xff]
    %v216 = vld [vmem:[#allocation2 + $0x130] sm:$0xff]
    %v217 = vld [vmem:[#allocation2 + $0x138] sm:$0xff]
    %v218 = vld [vmem:[#allocation2 + $0x140] sm:$0xff]
    %v219 = vld [vmem:[#allocation2 + $0x148] sm:$0xff]
    %v220 = vld [vmem:[#allocation2 + $0x150] sm:$0xff]
    %v221 = vld [vmem:[#allocation2 + $0x158] sm:$0xff]
    %v222 = vld [vmem:[#allocation2 + $0x160] sm:$0xff]
    %v223 = vld [vmem:[#allocation2 + $0x168] sm:$0xff]
    %v224 = vld [vmem:[#allocation2 + $0x170] sm:$0xff]
    %v225 = vld [vmem:[#allocation2 + $0x178] sm:$0xff]
    %v226 = vld [vmem:[#allocation2 + $0x180] sm:$0xff]
    %v227 = vld [vmem:[#allocation2 + $0x188] sm:$0xff]
    %v228 = vld [vmem:[#allocation2 + $0x190] sm:$0xff]
    %v229 = vld [vmem:[#allocation2 + $0x198] sm:$0xff]
    %v230 = vld [vmem:[#allocation2 + $0x1a0] sm:$0xff]
    %v231 = vld [vmem:[#allocation2 + $0x1a8] sm:$0xff]
    %v232 = vld [vmem:[#allocation2 + $0x1b0] sm:$0xff]
    %v233 = vld [vmem:[#allocation2 + $0x1b8] sm:$0xff]
    %v234 = vld [vmem:[#allocation2 + $0x1c0] sm:$0xff]
    %v235 = vld [vmem:[#allocation2 + $0x1c8] sm:$0xff]
    %v236 = vld [vmem:[#allocation2 + $0x1d0] sm:$0xff]
    %v237 = vld [vmem:[#allocation2 + $0x1d8] sm:$0xff]
    %v238 = vld [vmem:[#allocation2 + $0x1e0] sm:$0xff]
    %v239 = vld [vmem:[#allocation2 + $0x1e8] sm:$0xff]
    %v240 = vld [vmem:[#allocation2 + $0x1f0] sm:$0xff]
    %v241 = vld [vmem:[#allocation2 + $0x1f8] sm:$0xff]
    %v242 = vpack.c.bf16 %v163, %v162
    %v243 = vpack.c.bf16 %v165, %v164
    %v244 = vpack.c.bf16 %v167, %v166
    %v245 = vpack.c.bf16 %v169, %v168
    %v246 = vpack.c.bf16 %v171, %v170
    %v247 = vpack.c.bf16 %v173, %v172
    %v248 = vpack.c.bf16 %v175, %v174
    %v249 = vpack.c.bf16 %v177, %v176
    %v250 = vld [vmem:[#allocation6] sm:$0xff]
    %v251 = vld [vmem:[#allocation6 + $0x8] sm:$0xff]
    %v252 = vld [vmem:[#allocation6 + $0x10] sm:$0xff]
    %v253 = vld [vmem:[#allocation6 + $0x18] sm:$0xff]
    %v254 = vld [vmem:[#allocation6 + $0x20] sm:$0xff]
    %v255 = vld [vmem:[#allocation6 + $0x28] sm:$0xff]
    %v256 = vld [vmem:[#allocation6 + $0x30] sm:$0xff]
    %v257 = vld [vmem:[#allocation6 + $0x38] sm:$0xff]
    %v266 = vunpack.c.l.b16 %v250
    %v267 = vunpack.c.h.b16 %v250
    %v268 = vunpack.c.l.b16 %v251
    %v269 = vunpack.c.h.b16 %v251
    %v270 = vunpack.c.l.b16 %v252
    %v271 = vunpack.c.h.b16 %v252
    %v272 = vunpack.c.l.b16 %v253
    %v273 = vunpack.c.h.b16 %v253
    %v274 = vunpack.c.l.b16 %v254
    %v275 = vunpack.c.h.b16 %v254
    %v276 = vunpack.c.l.b16 %v255
    %v277 = vunpack.c.h.b16 %v255
    %v278 = vunpack.c.l.b16 %v256
    %v279 = vunpack.c.h.b16 %v256
    %v280 = vunpack.c.l.b16 %v257
    %v281 = vunpack.c.h.b16 %v257
    %v282 = vpack.c.b16 %v270, %v266
    %v283 = vpack.c.b16 %v271, %v267
    %v284 = vpack.c.b16 %v272, %v268
    %v285 = vpack.c.b16 %v273, %v269
    %v286 = vpack.c.b16 %v278, %v274
    %v287 = vpack.c.b16 %v279, %v275
    %v288 = vpack.c.b16 %v280, %v276
    %v289 = vpack.c.b16 %v281, %v277
    %vm298 = vcmask 261120
    %v300 = vsel %vm298, %v242, 0
    %v303 = vsel %vm298, %v243, 0
    %v306 = vsel %vm298, %v244, 0
    %v309 = vsel %vm298, %v245, 0
    %v312 = vsel %vm298, %v246, 0
    %v315 = vsel %vm298, %v247, 0
    %v318 = vsel %vm298, %v248, 0
    %v321 = vsel %vm298, %v249, 0
    %323 = vmatprep.subr.bf16.mxu0 0
    %324 = vmatpush1.bf16.msra.mxu0 0
    %325 = vmatprep.subr.bf16.mxu0 0
    %326 = vmatpush1.bf16.msra.mxu0 0
    %327 = vmatprep.subr.bf16.mxu0 0
    %328 = vmatpush1.bf16.msra.mxu0 0
    %329 = vmatprep.subr.bf16.mxu0 0
    %330 = vmatpush1.bf16.msra.mxu0 0
    %331 = vmatprep.subr.bf16.mxu0 0
    %332 = vmatpush1.bf16.msra.mxu0 0
    %333 = vmatprep.subr.bf16.mxu0 0
    %334 = vmatpush1.bf16.msra.mxu0 0
    %335 = vmatprep.subr.bf16.mxu0 %v287
    %336 = vmatpush1.bf16.msra.mxu0 %v286
    %337 = vmatprep.subr.bf16.mxu0 %v283
    %338 = vmatpush1.bf16.msra.mxu0 %v282
    %339 = vmatprep.subr.bf16.mxu0 0
    %340 = vmatpush2.bf16.msra.mxu0 0
    %341 = vmatprep.subr.bf16.mxu0 0
    %342 = vmatpush2.bf16.msra.mxu0 0
    %343 = vmatprep.subr.bf16.mxu0 0
    %344 = vmatpush2.bf16.msra.mxu0 0
    %345 = vmatprep.subr.bf16.mxu0 0
    %346 = vmatpush2.bf16.msra.mxu0 0
    %347 = vmatprep.subr.bf16.mxu0 0
    %348 = vmatpush2.bf16.msra.mxu0 0
    %349 = vmatprep.subr.bf16.mxu0 0
    %350 = vmatpush2.bf16.msra.mxu0 0
    %351 = vmatprep.subr.bf16.mxu0 0
    %352 = vmatpush2.bf16.msra.mxu0 0
    %353 = vmatprep.subr.bf16.mxu0 0
    %354 = vmatpush2.bf16.msra.mxu0 0
    %355 = vmatprep.mubr.bf16.mxu0 0
    %356 = vmatmul.mubr.bf16.gmra.mxu0 %v300
    %v357 = vpop.f32.mrf.mxu0
    %v358 = vadd.f32 0.0, %v357
    %v359 = vpop.f32.mrf.mxu0
    %v360 = vadd.f32 0.0, %v359
    %v361 = vpop.f32.mrf.mxu0
    %v362 = vadd.f32 0.0, %v361
    %v363 = vpop.f32.mrf.mxu0
    %v364 = vadd.f32 0.0, %v363
    %365 = vmatprep.mubr.bf16.mxu0 0
    %366 = vmatmul.mubr.bf16.gmra.mxu0 %v303
    %v367 = vpop.f32.mrf.mxu0
    %v368 = vadd.f32 0.0, %v367
    %v369 = vpop.f32.mrf.mxu0
    %v370 = vadd.f32 0.0, %v369
    %v371 = vpop.f32.mrf.mxu0
    %v372 = vadd.f32 0.0, %v371
    %v373 = vpop.f32.mrf.mxu0
    %v374 = vadd.f32 0.0, %v373
    %375 = vmatprep.mubr.bf16.mxu0 0
    %376 = vmatmul.mubr.bf16.gmra.mxu0 %v306
    %v377 = vpop.f32.mrf.mxu0
    %v378 = vadd.f32 0.0, %v377
    %v379 = vpop.f32.mrf.mxu0
    %v380 = vadd.f32 0.0, %v379
    %v381 = vpop.f32.mrf.mxu0
    %v382 = vadd.f32 0.0, %v381
    %v383 = vpop.f32.mrf.mxu0
    %v384 = vadd.f32 0.0, %v383
    %385 = vmatprep.mubr.bf16.mxu0 0
    %386 = vmatmul.mubr.bf16.gmra.mxu0 %v309
    %v387 = vpop.f32.mrf.mxu0
    %v388 = vadd.f32 0.0, %v387
    %v389 = vpop.f32.mrf.mxu0
    %v390 = vadd.f32 0.0, %v389
    %v391 = vpop.f32.mrf.mxu0
    %v392 = vadd.f32 0.0, %v391
    %v393 = vpop.f32.mrf.mxu0
    %v394 = vadd.f32 0.0, %v393
    %395 = vmatprep.mubr.bf16.mxu0 0
    %396 = vmatmul.mubr.bf16.gmra.mxu0 %v312
    %v397 = vpop.f32.mrf.mxu0
    %v398 = vadd.f32 0.0, %v397
    %v399 = vpop.f32.mrf.mxu0
    %v400 = vadd.f32 0.0, %v399
    %v401 = vpop.f32.mrf.mxu0
    %v402 = vadd.f32 0.0, %v401
    %v403 = vpop.f32.mrf.mxu0
    %v404 = vadd.f32 0.0, %v403
    %405 = vmatprep.mubr.bf16.mxu0 0
    %406 = vmatmul.mubr.bf16.gmra.mxu0 %v315
    %v407 = vpop.f32.mrf.mxu0
    %v408 = vadd.f32 0.0, %v407
    %v409 = vpop.f32.mrf.mxu0
    %v410 = vadd.f32 0.0, %v409
    %v411 = vpop.f32.mrf.mxu0
    %v412 = vadd.f32 0.0, %v411
    %v413 = vpop.f32.mrf.mxu0
    %v414 = vadd.f32 0.0, %v413
    %415 = vmatprep.mubr.bf16.mxu0 0
    %416 = vmatmul.mubr.bf16.gmra.mxu0 %v318
    %v417 = vpop.f32.mrf.mxu0
    %v418 = vadd.f32 0.0, %v417
    %v419 = vpop.f32.mrf.mxu0
    %v420 = vadd.f32 0.0, %v419
    %v421 = vpop.f32.mrf.mxu0
    %v422 = vadd.f32 0.0, %v421
    %v423 = vpop.f32.mrf.mxu0
    %v424 = vadd.f32 0.0, %v423
    %425 = vmatprep.mubr.bf16.mxu0 0
    %426 = vmatmul.mubr.bf16.gmra.mxu0 %v321
    %v427 = vpop.f32.mrf.mxu0
    %v428 = vadd.f32 0.0, %v427
    %v429 = vpop.f32.mrf.mxu0
    %v430 = vadd.f32 0.0, %v429
    %v431 = vpop.f32.mrf.mxu0
    %v432 = vadd.f32 0.0, %v431
    %v433 = vpop.f32.mrf.mxu0
    %v434 = vadd.f32 0.0, %v433
    %435 = vdwg.mxu0
    %436 = vmatprep.subr.bf16.mxu0 0
    %437 = vmatpush1.bf16.msra.mxu0 0
    %438 = vmatprep.subr.bf16.mxu0 0
    %439 = vmatpush1.bf16.msra.mxu0 0
    %440 = vmatprep.subr.bf16.mxu0 0
    %441 = vmatpush1.bf16.msra.mxu0 0
    %442 = vmatprep.subr.bf16.mxu0 0
    %443 = vmatpush1.bf16.msra.mxu0 0
    %444 = vmatprep.subr.bf16.mxu0 0
    %445 = vmatpush1.bf16.msra.mxu0 0
    %446 = vmatprep.subr.bf16.mxu0 0
    %447 = vmatpush1.bf16.msra.mxu0 0
    %448 = vmatprep.subr.bf16.mxu0 %v289
    %449 = vmatpush1.bf16.msra.mxu0 %v288
    %450 = vmatprep.subr.bf16.mxu0 %v285
    %451 = vmatpush1.bf16.msra.mxu0 %v284
    %452 = vmatprep.subr.bf16.mxu0 0
    %453 = vmatpush2.bf16.msra.mxu0 0
    %454 = vmatprep.subr.bf16.mxu0 0
    %455 = vmatpush2.bf16.msra.mxu0 0
    %456 = vmatprep.subr.bf16.mxu0 0
    %457 = vmatpush2.bf16.msra.mxu0 0
    %458 = vmatprep.subr.bf16.mxu0 0
    %459 = vmatpush2.bf16.msra.mxu0 0
    %460 = vmatprep.subr.bf16.mxu0 0
    %461 = vmatpush2.bf16.msra.mxu0 0
    %462 = vmatprep.subr.bf16.mxu0 0
    %463 = vmatpush2.bf16.msra.mxu0 0
    %464 = vmatprep.subr.bf16.mxu0 0
    %465 = vmatpush2.bf16.msra.mxu0 0
    %466 = vmatprep.subr.bf16.mxu0 0
    %467 = vmatpush2.bf16.msra.mxu0 0
    %468 = vmatprep.mubr.bf16.mxu0 0
    %469 = vmatmul.mubr.bf16.gmra.mxu0 %v300
    %v470 = vpop.f32.mrf.mxu0
    %v471 = vadd.f32 0.0, %v470
    %v472 = vpop.f32.mrf.mxu0
    %v473 = vadd.f32 0.0, %v472
    %v474 = vpop.f32.mrf.mxu0
    %v475 = vadd.f32 0.0, %v474
    %v476 = vpop.f32.mrf.mxu0
    %v477 = vadd.f32 0.0, %v476
    %478 = vmatprep.mubr.bf16.mxu0 0
    %479 = vmatmul.mubr.bf16.gmra.mxu0 %v303
    %v480 = vpop.f32.mrf.mxu0
    %v481 = vadd.f32 0.0, %v480
    %v482 = vpop.f32.mrf.mxu0
    %v483 = vadd.f32 0.0, %v482
    %v484 = vpop.f32.mrf.mxu0
    %v485 = vadd.f32 0.0, %v484
    %v486 = vpop.f32.mrf.mxu0
    %v487 = vadd.f32 0.0, %v486
    %488 = vmatprep.mubr.bf16.mxu0 0
    %489 = vmatmul.mubr.bf16.gmra.mxu0 %v306
    %v490 = vpop.f32.mrf.mxu0
    %v491 = vadd.f32 0.0, %v490
    %v492 = vpop.f32.mrf.mxu0
    %v493 = vadd.f32 0.0, %v492
    %v494 = vpop.f32.mrf.mxu0
    %v495 = vadd.f32 0.0, %v494
    %v496 = vpop.f32.mrf.mxu0
    %v497 = vadd.f32 0.0, %v496
    %498 = vmatprep.mubr.bf16.mxu0 0
    %499 = vmatmul.mubr.bf16.gmra.mxu0 %v309
    %v500 = vpop.f32.mrf.mxu0
    %v501 = vadd.f32 0.0, %v500
    %v502 = vpop.f32.mrf.mxu0
    %v503 = vadd.f32 0.0, %v502
    %v504 = vpop.f32.mrf.mxu0
    %v505 = vadd.f32 0.0, %v504
    %v506 = vpop.f32.mrf.mxu0
    %v507 = vadd.f32 0.0, %v506
    %508 = vmatprep.mubr.bf16.mxu0 0
    %509 = vmatmul.mubr.bf16.gmra.mxu0 %v312
    %v510 = vpop.f32.mrf.mxu0
    %v511 = vadd.f32 0.0, %v510
    %v512 = vpop.f32.mrf.mxu0
    %v513 = vadd.f32 0.0, %v512
    %v514 = vpop.f32.mrf.mxu0
    %v515 = vadd.f32 0.0, %v514
    %v516 = vpop.f32.mrf.mxu0
    %v517 = vadd.f32 0.0, %v516
    %518 = vmatprep.mubr.bf16.mxu0 0
    %519 = vmatmul.mubr.bf16.gmra.mxu0 %v315
    %v520 = vpop.f32.mrf.mxu0
    %v521 = vadd.f32 0.0, %v520
    %v522 = vpop.f32.mrf.mxu0
    %v523 = vadd.f32 0.0, %v522
    %v524 = vpop.f32.mrf.mxu0
    %v525 = vadd.f32 0.0, %v524
    %v526 = vpop.f32.mrf.mxu0
    %v527 = vadd.f32 0.0, %v526
    %528 = vmatprep.mubr.bf16.mxu0 0
    %529 = vmatmul.mubr.bf16.gmra.mxu0 %v318
    %v530 = vpop.f32.mrf.mxu0
    %v531 = vadd.f32 0.0, %v530
    %v532 = vpop.f32.mrf.mxu0
    %v533 = vadd.f32 0.0, %v532
    %v534 = vpop.f32.mrf.mxu0
    %v535 = vadd.f32 0.0, %v534
    %v536 = vpop.f32.mrf.mxu0
    %v537 = vadd.f32 0.0, %v536
    %538 = vmatprep.mubr.bf16.mxu0 0
    %539 = vmatmul.mubr.bf16.gmra.mxu0 %v321
    %v540 = vpop.f32.mrf.mxu0
    %v541 = vadd.f32 0.0, %v540
    %v542 = vpop.f32.mrf.mxu0
    %v543 = vadd.f32 0.0, %v542
    %v544 = vpop.f32.mrf.mxu0
    %v545 = vadd.f32 0.0, %v544
    %v546 = vpop.f32.mrf.mxu0
    %v547 = vadd.f32 0.0, %v546
    %548 = vdwg.mxu0
    %v549 = vadd.f32 %v178, %v358
    %v550 = vadd.f32 %v179, %v360
    %v551 = vadd.f32 %v180, %v471
    %v552 = vadd.f32 %v181, %v473
    %v553 = vadd.f32 %v182, %v362
    %v554 = vadd.f32 %v183, %v364
    %v555 = vadd.f32 %v184, %v475
    %v556 = vadd.f32 %v185, %v477
    %v557 = vadd.f32 %v186, %v368
    %v558 = vadd.f32 %v187, %v370
    %v559 = vadd.f32 %v188, %v481
    %v560 = vadd.f32 %v189, %v483
    %v561 = vadd.f32 %v190, %v372
    %v562 = vadd.f32 %v191, %v374
    %v563 = vadd.f32 %v192, %v485
    %v564 = vadd.f32 %v193, %v487
    %v565 = vadd.f32 %v194, %v378
    %v566 = vadd.f32 %v195, %v380
    %v567 = vadd.f32 %v196, %v491
    %v568 = vadd.f32 %v197, %v493
    %v569 = vadd.f32 %v198, %v382
    %v570 = vadd.f32 %v199, %v384
    %v571 = vadd.f32 %v200, %v495
    %v572 = vadd.f32 %v201, %v497
    %v573 = vadd.f32 %v202, %v388
    %v574 = vadd.f32 %v203, %v390
    %v575 = vadd.f32 %v204, %v501
    %v576 = vadd.f32 %v205, %v503
    %v577 = vadd.f32 %v206, %v392
    %v578 = vadd.f32 %v207, %v394
    %v579 = vadd.f32 %v208, %v505
    %v580 = vadd.f32 %v209, %v507
    %v581 = vadd.f32 %v210, %v398
    %v582 = vadd.f32 %v211, %v400
    %v583 = vadd.f32 %v212, %v511
    %v584 = vadd.f32 %v213, %v513
    %v585 = vadd.f32 %v214, %v402
    %v586 = vadd.f32 %v215, %v404
    %v587 = vadd.f32 %v216, %v515
    %v588 = vadd.f32 %v217, %v517
    %v589 = vadd.f32 %v218, %v408
    %v590 = vadd.f32 %v219, %v410
    %v591 = vadd.f32 %v220, %v521
    %v592 = vadd.f32 %v221, %v523
    %v593 = vadd.f32 %v222, %v412
    %v594 = vadd.f32 %v223, %v414
    %v595 = vadd.f32 %v224, %v525
    %v596 = vadd.f32 %v225, %v527
    %v597 = vadd.f32 %v226, %v418
    %v598 = vadd.f32 %v227, %v420
    %v599 = vadd.f32 %v228, %v531
    %v600 = vadd.f32 %v229, %v533
    %v601 = vadd.f32 %v230, %v422
    %v602 = vadd.f32 %v231, %v424
    %v603 = vadd.f32 %v232, %v535
    %v604 = vadd.f32 %v233, %v537
    %v605 = vadd.f32 %v234, %v428
    %v606 = vadd.f32 %v235, %v430
    %v607 = vadd.f32 %v236, %v541
    %v608 = vadd.f32 %v237, %v543
    %v609 = vadd.f32 %v238, %v432
    %v610 = vadd.f32 %v239, %v434
    %v611 = vadd.f32 %v240, %v545
    %v612 = vadd.f32 %v241, %v547
    %613 = vst [vmem:[#allocation2] sm:$0xff] %v549
    %614 = vst [vmem:[#allocation2 + $0x8] sm:$0xff] %v550
    %615 = vst [vmem:[#allocation2 + $0x10] sm:$0xff] %v551
    %616 = vst [vmem:[#allocation2 + $0x18] sm:$0xff] %v552
    %617 = vst [vmem:[#allocation2 + $0x20] sm:$0xff] %v553
    %618 = vst [vmem:[#allocation2 + $0x28] sm:$0xff] %v554
    %619 = vst [vmem:[#allocation2 + $0x30] sm:$0xff] %v555
    %620 = vst [vmem:[#allocation2 + $0x38] sm:$0xff] %v556
    %621 = vst [vmem:[#allocation2 + $0x40] sm:$0xff] %v557
    %622 = vst [vmem:[#allocation2 + $0x48] sm:$0xff] %v558
    %623 = vst [vmem:[#allocation2 + $0x50] sm:$0xff] %v559
    %624 = vst [vmem:[#allocation2 + $0x58] sm:$0xff] %v560
    %625 = vst [vmem:[#allocation2 + $0x60] sm:$0xff] %v561
    %626 = vst [vmem:[#allocation2 + $0x68] sm:$0xff] %v562
    %627 = vst [vmem:[#allocation2 + $0x70] sm:$0xff] %v563
    %628 = vst [vmem:[#allocation2 + $0x78] sm:$0xff] %v564
    %629 = vst [vmem:[#allocation2 + $0x80] sm:$0xff] %v565
    %630 = vst [vmem:[#allocation2 + $0x88] sm:$0xff] %v566
    %631 = vst [vmem:[#allocation2 + $0x90] sm:$0xff] %v567
    %632 = vst [vmem:[#allocation2 + $0x98] sm:$0xff] %v568
    %633 = vst [vmem:[#allocation2 + $0xa0] sm:$0xff] %v569
    %634 = vst [vmem:[#allocation2 + $0xa8] sm:$0xff] %v570
    %635 = vst [vmem:[#allocation2 + $0xb0] sm:$0xff] %v571
    %636 = vst [vmem:[#allocation2 + $0xb8] sm:$0xff] %v572
    %637 = vst [vmem:[#allocation2 + $0xc0] sm:$0xff] %v573
    %638 = vst [vmem:[#allocation2 + $0xc8] sm:$0xff] %v574
    %639 = vst [vmem:[#allocation2 + $0xd0] sm:$0xff] %v575
    %640 = vst [vmem:[#allocation2 + $0xd8] sm:$0xff] %v576
    %641 = vst [vmem:[#allocation2 + $0xe0] sm:$0xff] %v577
    %642 = vst [vmem:[#allocation2 + $0xe8] sm:$0xff] %v578
    %643 = vst [vmem:[#allocation2 + $0xf0] sm:$0xff] %v579
    %644 = vst [vmem:[#allocation2 + $0xf8] sm:$0xff] %v580
    %645 = vst [vmem:[#allocation2 + $0x100] sm:$0xff] %v581
    %646 = vst [vmem:[#allocation2 + $0x108] sm:$0xff] %v582
    %647 = vst [vmem:[#allocation2 + $0x110] sm:$0xff] %v583
    %648 = vst [vmem:[#allocation2 + $0x118] sm:$0xff] %v584
    %649 = vst [vmem:[#allocation2 + $0x120] sm:$0xff] %v585
    %650 = vst [vmem:[#allocation2 + $0x128] sm:$0xff] %v586
    %651 = vst [vmem:[#allocation2 + $0x130] sm:$0xff] %v587
    %652 = vst [vmem:[#allocation2 + $0x138] sm:$0xff] %v588
    %653 = vst [vmem:[#allocation2 + $0x140] sm:$0xff] %v589
    %654 = vst [vmem:[#allocation2 + $0x148] sm:$0xff] %v590
    %655 = vst [vmem:[#allocation2 + $0x150] sm:$0xff] %v591
    %656 = vst [vmem:[#allocation2 + $0x158] sm:$0xff] %v592
    %657 = vst [vmem:[#allocation2 + $0x160] sm:$0xff] %v593
    %658 = vst [vmem:[#allocation2 + $0x168] sm:$0xff] %v594
    %659 = vst [vmem:[#allocation2 + $0x170] sm:$0xff] %v595
    %660 = vst [vmem:[#allocation2 + $0x178] sm:$0xff] %v596
    %661 = vst [vmem:[#allocation2 + $0x180] sm:$0xff] %v597
    %662 = vst [vmem:[#allocation2 + $0x188] sm:$0xff] %v598
    %663 = vst [vmem:[#allocation2 + $0x190] sm:$0xff] %v599
    %664 = vst [vmem:[#allocation2 + $0x198] sm:$0xff] %v600
    %665 = vst [vmem:[#allocation2 + $0x1a0] sm:$0xff] %v601
    %666 = vst [vmem:[#allocation2 + $0x1a8] sm:$0xff] %v602
    %667 = vst [vmem:[#allocation2 + $0x1b0] sm:$0xff] %v603
    %668 = vst [vmem:[#allocation2 + $0x1b8] sm:$0xff] %v604
    %669 = vst [vmem:[#allocation2 + $0x1c0] sm:$0xff] %v605
    %670 = vst [vmem:[#allocation2 + $0x1c8] sm:$0xff] %v606
    %671 = vst [vmem:[#allocation2 + $0x1d0] sm:$0xff] %v607
    %672 = vst [vmem:[#allocation2 + $0x1d8] sm:$0xff] %v608
    %673 = vst [vmem:[#allocation2 + $0x1e0] sm:$0xff] %v609
    %674 = vst [vmem:[#allocation2 + $0x1e8] sm:$0xff] %v610
    %675 = vst [vmem:[#allocation2 + $0x1f0] sm:$0xff] %v611
    %676 = vst [vmem:[#allocation2 + $0x1f8] sm:$0xff] %v612
    // Predicated region
    $region54: #{tpu_custom_call.1} parent=1 // pred_check
      %p677 = pneg %p94
    $region55: #{tpu_custom_call.1} parent=1 // pred_check_branch
      %679 = sbr.rel (%p677) target = $region57
    $region56: #{tpu_custom_call.1} parent=1 // pred_region
      %v680 = vld [vmem:[#allocation2] sm:$0xff]
      %v681 = vld [vmem:[#allocation2 + $0x8] sm:$0xff]
      %v682 = vld [vmem:[#allocation2 + $0x10] sm:$0xff]
      %v683 = vld [vmem:[#allocation2 + $0x18] sm:$0xff]
      %v684 = vld [vmem:[#allocation2 + $0x20] sm:$0xff]
      %v685 = vld [vmem:[#allocation2 + $0x28] sm:$0xff]
      %v686 = vld [vmem:[#allocation2 + $0x30] sm:$0xff]
      %v687 = vld [vmem:[#allocation2 + $0x38] sm:$0xff]
      %v688 = vld [vmem:[#allocation2 + $0x40] sm:$0xff]
      %v689 = vld [vmem:[#allocation2 + $0x48] sm:$0xff]
      %v690 = vld [vmem:[#allocation2 + $0x50] sm:$0xff]
      %v691 = vld [vmem:[#allocation2 + $0x58] sm:$0xff]
      %v692 = vld [vmem:[#allocation2 + $0x60] sm:$0xff]
      %v693 = vld [vmem:[#allocation2 + $0x68] sm:$0xff]
      %v694 = vld [vmem:[#allocation2 + $0x70] sm:$0xff]
      %v695 = vld [vmem:[#allocation2 + $0x78] sm:$0xff]
      %v696 = vld [vmem:[#allocation2 + $0x80] sm:$0xff]
      %v697 = vld [vmem:[#allocation2 + $0x88] sm:$0xff]
      %v698 = vld [vmem:[#allocation2 + $0x90] sm:$0xff]
      %v699 = vld [vmem:[#allocation2 + $0x98] sm:$0xff]
      %v700 = vld [vmem:[#allocation2 + $0xa0] sm:$0xff]
      %v701 = vld [vmem:[#allocation2 + $0xa8] sm:$0xff]
      %v702 = vld [vmem:[#allocation2 + $0xb0] sm:$0xff]
      %v703 = vld [vmem:[#allocation2 + $0xb8] sm:$0xff]
      %v704 = vld [vmem:[#allocation2 + $0xc0] sm:$0xff]
      %v705 = vld [vmem:[#allocation2 + $0xc8] sm:$0xff]
      %v706 = vld [vmem:[#allocation2 + $0xd0] sm:$0xff]
      %v707 = vld [vmem:[#allocation2 + $0xd8] sm:$0xff]
      %v708 = vld [vmem:[#allocation2 + $0xe0] sm:$0xff]
      %v709 = vld [vmem:[#allocation2 + $0xe8] sm:$0xff]
      %v710 = vld [vmem:[#allocation2 + $0xf0] sm:$0xff]
      %v711 = vld [vmem:[#allocation2 + $0xf8] sm:$0xff]
      %v712 = vld [vmem:[#allocation2 + $0x100] sm:$0xff]
      %v713 = vld [vmem:[#allocation2 + $0x108] sm:$0xff]
      %v714 = vld [vmem:[#allocation2 + $0x110] sm:$0xff]
      %v715 = vld [vmem:[#allocation2 + $0x118] sm:$0xff]
      %v716 = vld [vmem:[#allocation2 + $0x120] sm:$0xff]
      %v717 = vld [vmem:[#allocation2 + $0x128] sm:$0xff]
      %v718 = vld [vmem:[#allocation2 + $0x130] sm:$0xff]
      %v719 = vld [vmem:[#allocation2 + $0x138] sm:$0xff]
      %v720 = vld [vmem:[#allocation2 + $0x140] sm:$0xff]
      %v721 = vld [vmem:[#allocation2 + $0x148] sm:$0xff]
      %v722 = vld [vmem:[#allocation2 + $0x150] sm:$0xff]
      %v723 = vld [vmem:[#allocation2 + $0x158] sm:$0xff]
      %v724 = vld [vmem:[#allocation2 + $0x160] sm:$0xff]
      %v725 = vld [vmem:[#allocation2 + $0x168] sm:$0xff]
      %v726 = vld [vmem:[#allocation2 + $0x170] sm:$0xff]
      %v727 = vld [vmem:[#allocation2 + $0x178] sm:$0xff]
      %v728 = vld [vmem:[#allocation2 + $0x180] sm:$0xff]
      %v729 = vld [vmem:[#allocation2 + $0x188] sm:$0xff]
      %v730 = vld [vmem:[#allocation2 + $0x190] sm:$0xff]
      %v731 = vld [vmem:[#allocation2 + $0x198] sm:$0xff]
      %v732 = vld [vmem:[#allocation2 + $0x1a0] sm:$0xff]
      %v733 = vld [vmem:[#allocation2 + $0x1a8] sm:$0xff]
      %v734 = vld [vmem:[#allocation2 + $0x1b0] sm:$0xff]
      %v735 = vld [vmem:[#allocation2 + $0x1b8] sm:$0xff]
      %v736 = vld [vmem:[#allocation2 + $0x1c0] sm:$0xff]
      %v737 = vld [vmem:[#allocation2 + $0x1c8] sm:$0xff]
      %v738 = vld [vmem:[#allocation2 + $0x1d0] sm:$0xff]
      %v739 = vld [vmem:[#allocation2 + $0x1d8] sm:$0xff]
      %v740 = vld [vmem:[#allocation2 + $0x1e0] sm:$0xff]
      %v741 = vld [vmem:[#allocation2 + $0x1e8] sm:$0xff]
      %v742 = vld [vmem:[#allocation2 + $0x1f0] sm:$0xff]
      %v743 = vld [vmem:[#allocation2 + $0x1f8] sm:$0xff]
      %v744 = vld [vmem:[#allocation8] sm:$0xf]
      %v746 = vlaneseq
      %v747 = vshrl.u32 %v746, 7
      %v748 = vsub.s32 0, %v747
      %v749 = vrot.slane %v744, %v748
      %v750 = vlaneseq
      %v751 = vshrl.u32 %v750, 7
      %v752 = vsub.s32 1, %v751
      %v753 = vrot.slane %v744, %v752
      %v754 = vlaneseq
      %v755 = vshrl.u32 %v754, 7
      %v756 = vsub.s32 2, %v755
      %v757 = vrot.slane %v744, %v756
      %v758 = vlaneseq
      %v759 = vshrl.u32 %v758, 7
      %v760 = vsub.s32 3, %v759
      %v761 = vrot.slane %v744, %v760
      %v766 = vadd.f32 %v680, %v749
      %v767 = vadd.f32 %v681, %v753
      %v768 = vadd.f32 %v682, %v757
      %v769 = vadd.f32 %v683, %v761
      %v770 = vadd.f32 %v684, %v749
      %v771 = vadd.f32 %v685, %v753
      %v772 = vadd.f32 %v686, %v757
      %v773 = vadd.f32 %v687, %v761
      %v774 = vadd.f32 %v688, %v749
      %v775 = vadd.f32 %v689, %v753
      %v776 = vadd.f32 %v690, %v757
      %v777 = vadd.f32 %v691, %v761
      %v778 = vadd.f32 %v692, %v749
      %v779 = vadd.f32 %v693, %v753
      %v780 = vadd.f32 %v694, %v757
      %v781 = vadd.f32 %v695, %v761
      %v782 = vadd.f32 %v696, %v749
      %v783 = vadd.f32 %v697, %v753
      %v784 = vadd.f32 %v698, %v757
      %v785 = vadd.f32 %v699, %v761
      %v786 = vadd.f32 %v700, %v749
      %v787 = vadd.f32 %v701, %v753
      %v788 = vadd.f32 %v702, %v757
      %v789 = vadd.f32 %v703, %v761
      %v790 = vadd.f32 %v704, %v749
      %v791 = vadd.f32 %v705, %v753
      %v792 = vadd.f32 %v706, %v757
      %v793 = vadd.f32 %v707, %v761
      %v794 = vadd.f32 %v708, %v749
      %v795 = vadd.f32 %v709, %v753
      %v796 = vadd.f32 %v710, %v757
      %v797 = vadd.f32 %v711, %v761
      %v798 = vadd.f32 %v712, %v749
      %v799 = vadd.f32 %v713, %v753
      %v800 = vadd.f32 %v714, %v757
      %v801 = vadd.f32 %v715, %v761
      %v802 = vadd.f32 %v716, %v749
      %v803 = vadd.f32 %v717, %v753
      %v804 = vadd.f32 %v718, %v757
      %v805 = vadd.f32 %v719, %v761
      %v806 = vadd.f32 %v720, %v749
      %v807 = vadd.f32 %v721, %v753
      %v808 = vadd.f32 %v722, %v757
      %v809 = vadd.f32 %v723, %v761
      %v810 = vadd.f32 %v724, %v749
      %v811 = vadd.f32 %v725, %v753
      %v812 = vadd.f32 %v726, %v757
      %v813 = vadd.f32 %v727, %v761
      %v814 = vadd.f32 %v728, %v749
      %v815 = vadd.f32 %v729, %v753
      %v816 = vadd.f32 %v730, %v757
      %v817 = vadd.f32 %v731, %v761
      %v818 = vadd.f32 %v732, %v749
      %v819 = vadd.f32 %v733, %v753
      %v820 = vadd.f32 %v734, %v757
      %v821 = vadd.f32 %v735, %v761
      %v822 = vadd.f32 %v736, %v749
      %v823 = vadd.f32 %v737, %v753
      %v824 = vadd.f32 %v738, %v757
      %v825 = vadd.f32 %v739, %v761
      %v826 = vadd.f32 %v740, %v749
      %v827 = vadd.f32 %v741, %v753
      %v828 = vadd.f32 %v742, %v757
      %v829 = vadd.f32 %v743, %v761
      %v830 = vmax.f32 %v766, 0.0
      %v831 = vmax.f32 %v767, 0.0
      %v832 = vmax.f32 %v768, 0.0
      %v833 = vmax.f32 %v769, 0.0
      %v834 = vmax.f32 %v770, 0.0
      %v835 = vmax.f32 %v771, 0.0
      %v836 = vmax.f32 %v772, 0.0
      %v837 = vmax.f32 %v773, 0.0
      %v838 = vmax.f32 %v774, 0.0
      %v839 = vmax.f32 %v775, 0.0
      %v840 = vmax.f32 %v776, 0.0
      %v841 = vmax.f32 %v777, 0.0
      %v842 = vmax.f32 %v778, 0.0
      %v843 = vmax.f32 %v779, 0.0
      %v844 = vmax.f32 %v780, 0.0
      %v845 = vmax.f32 %v781, 0.0
      %v846 = vmax.f32 %v782, 0.0
      %v847 = vmax.f32 %v783, 0.0
      %v848 = vmax.f32 %v784, 0.0
      %v849 = vmax.f32 %v785, 0.0
      %v850 = vmax.f32 %v786, 0.0
      %v851 = vmax.f32 %v787, 0.0
      %v852 = vmax.f32 %v788, 0.0
      %v853 = vmax.f32 %v789, 0.0
      %v854 = vmax.f32 %v790, 0.0
      %v855 = vmax.f32 %v791, 0.0
      %v856 = vmax.f32 %v792, 0.0
      %v857 = vmax.f32 %v793, 0.0
      %v858 = vmax.f32 %v794, 0.0
      %v859 = vmax.f32 %v795, 0.0
      %v860 = vmax.f32 %v796, 0.0
      %v861 = vmax.f32 %v797, 0.0
      %v862 = vmax.f32 %v798, 0.0
      %v863 = vmax.f32 %v799, 0.0
      %v864 = vmax.f32 %v800, 0.0
      %v865 = vmax.f32 %v801, 0.0
      %v866 = vmax.f32 %v802, 0.0
      %v867 = vmax.f32 %v803, 0.0
      %v868 = vmax.f32 %v804, 0.0
      %v869 = vmax.f32 %v805, 0.0
      %v870 = vmax.f32 %v806, 0.0
      %v871 = vmax.f32 %v807, 0.0
      %v872 = vmax.f32 %v808, 0.0
      %v873 = vmax.f32 %v809, 0.0
      %v874 = vmax.f32 %v810, 0.0
      %v875 = vmax.f32 %v811, 0.0
      %v876 = vmax.f32 %v812, 0.0
      %v877 = vmax.f32 %v813, 0.0
      %v878 = vmax.f32 %v814, 0.0
      %v879 = vmax.f32 %v815, 0.0
      %v880 = vmax.f32 %v816, 0.0
      %v881 = vmax.f32 %v817, 0.0
      %v882 = vmax.f32 %v818, 0.0
      %v883 = vmax.f32 %v819, 0.0
      %v884 = vmax.f32 %v820, 0.0
      %v885 = vmax.f32 %v821, 0.0
      %v886 = vmax.f32 %v822, 0.0
      %v887 = vmax.f32 %v823, 0.0
      %v888 = vmax.f32 %v824, 0.0
      %v889 = vmax.f32 %v825, 0.0
      %v890 = vmax.f32 %v826, 0.0
      %v891 = vmax.f32 %v827, 0.0
      %v892 = vmax.f32 %v828, 0.0
      %v893 = vmax.f32 %v829, 0.0
      %v894 = vpack.c.bf16 %v834, %v830
      %v895 = vpack.c.bf16 %v835, %v831
      %v896 = vpack.c.bf16 %v836, %v832
      %v897 = vpack.c.bf16 %v837, %v833
      %v898 = vpack.c.bf16 %v842, %v838
      %v899 = vpack.c.bf16 %v843, %v839
      %v900 = vpack.c.bf16 %v844, %v840
      %v901 = vpack.c.bf16 %v845, %v841
      %v902 = vpack.c.bf16 %v850, %v846
      %v903 = vpack.c.bf16 %v851, %v847
      %v904 = vpack.c.bf16 %v852, %v848
      %v905 = vpack.c.bf16 %v853, %v849
      %v906 = vpack.c.bf16 %v858, %v854
      %v907 = vpack.c.bf16 %v859, %v855
      %v908 = vpack.c.bf16 %v860, %v856
      %v909 = vpack.c.bf16 %v861, %v857
      %v910 = vpack.c.bf16 %v866, %v862
      %v911 = vpack.c.bf16 %v867, %v863
      %v912 = vpack.c.bf16 %v868, %v864
      %v913 = vpack.c.bf16 %v869, %v865
      %v914 = vpack.c.bf16 %v874, %v870
      %v915 = vpack.c.bf16 %v875, %v871
      %v916 = vpack.c.bf16 %v876, %v872
      %v917 = vpack.c.bf16 %v877, %v873
      %v918 = vpack.c.bf16 %v882, %v878
      %v919 = vpack.c.bf16 %v883, %v879
      %v920 = vpack.c.bf16 %v884, %v880
      %v921 = vpack.c.bf16 %v885, %v881
      %v922 = vpack.c.bf16 %v890, %v886
      %v923 = vpack.c.bf16 %v891, %v887
      %v924 = vpack.c.bf16 %v892, %v888
      %v925 = vpack.c.bf16 %v893, %v889
      %v926 = vld [vmem:[#allocation9] sm:$0xff]
      %v927 = vld [vmem:[#allocation9 + $0x8] sm:$0xff]
      %v928 = vld [vmem:[#allocation9 + $0x10] sm:$0xff]
      %v929 = vld [vmem:[#allocation9 + $0x18] sm:$0xff]
      %v930 = vld [vmem:[#allocation9 + $0x20] sm:$0xff]
      %v931 = vld [vmem:[#allocation9 + $0x28] sm:$0xff]
      %v932 = vld [vmem:[#allocation9 + $0x30] sm:$0xff]
      %v933 = vld [vmem:[#allocation9 + $0x38] sm:$0xff]
      %v934 = vld [vmem:[#allocation9 + $0x40] sm:$0xff]
      %v935 = vld [vmem:[#allocation9 + $0x48] sm:$0xff]
      %v936 = vld [vmem:[#allocation9 + $0x50] sm:$0xff]
      %v937 = vld [vmem:[#allocation9 + $0x58] sm:$0xff]
      %v938 = vld [vmem:[#allocation9 + $0x60] sm:$0xff]
      %v939 = vld [vmem:[#allocation9 + $0x68] sm:$0xff]
      %v940 = vld [vmem:[#allocation9 + $0x70] sm:$0xff]
      %v941 = vld [vmem:[#allocation9 + $0x78] sm:$0xff]
      %v942 = vld [vmem:[#allocation9 + $0x80] sm:$0xff]
      %v943 = vld [vmem:[#allocation9 + $0x88] sm:$0xff]
      %v944 = vld [vmem:[#allocation9 + $0x90] sm:$0xff]
      %v945 = vld [vmem:[#allocation9 + $0x98] sm:$0xff]
      %v946 = vld [vmem:[#allocation9 + $0xa0] sm:$0xff]
      %v947 = vld [vmem:[#allocation9 + $0xa8] sm:$0xff]
      %v948 = vld [vmem:[#allocation9 + $0xb0] sm:$0xff]
      %v949 = vld [vmem:[#allocation9 + $0xb8] sm:$0xff]
      %v950 = vld [vmem:[#allocation9 + $0xc0] sm:$0xff]
      %v951 = vld [vmem:[#allocation9 + $0xc8] sm:$0xff]
      %v952 = vld [vmem:[#allocation9 + $0xd0] sm:$0xff]
      %v953 = vld [vmem:[#allocation9 + $0xd8] sm:$0xff]
      %v954 = vld [vmem:[#allocation9 + $0xe0] sm:$0xff]
      %v955 = vld [vmem:[#allocation9 + $0xe8] sm:$0xff]
      %v956 = vld [vmem:[#allocation9 + $0xf0] sm:$0xff]
      %v957 = vld [vmem:[#allocation9 + $0xf8] sm:$0xff]
      %v958 = vld [vmem:[#allocation9 + $0x100] sm:$0xff]
      %v959 = vld [vmem:[#allocation9 + $0x108] sm:$0xff]
      %v960 = vld [vmem:[#allocation9 + $0x110] sm:$0xff]
      %v961 = vld [vmem:[#allocation9 + $0x118] sm:$0xff]
      %v962 = vld [vmem:[#allocation9 + $0x120] sm:$0xff]
      %v963 = vld [vmem:[#allocation9 + $0x128] sm:$0xff]
      %v964 = vld [vmem:[#allocation9 + $0x130] sm:$0xff]
      %v965 = vld [vmem:[#allocation9 + $0x138] sm:$0xff]
      %v966 = vld [vmem:[#allocation9 + $0x140] sm:$0xff]
      %v967 = vld [vmem:[#allocation9 + $0x148] sm:$0xff]
      %v968 = vld [vmem:[#allocation9 + $0x150] sm:$0xff]
      %v969 = vld [vmem:[#allocation9 + $0x158] sm:$0xff]
      %v970 = vld [vmem:[#allocation9 + $0x160] sm:$0xff]
      %v971 = vld [vmem:[#allocation9 + $0x168] sm:$0xff]
      %v972 = vld [vmem:[#allocation9 + $0x170] sm:$0xff]
      %v973 = vld [vmem:[#allocation9 + $0x178] sm:$0xff]
      %v974 = vld [vmem:[#allocation9 + $0x180] sm:$0xff]
      %v975 = vld [vmem:[#allocation9 + $0x188] sm:$0xff]
      %v976 = vld [vmem:[#allocation9 + $0x190] sm:$0xff]
      %v977 = vld [vmem:[#allocation9 + $0x198] sm:$0xff]
      %v978 = vld [vmem:[#allocation9 + $0x1a0] sm:$0xff]
      %v979 = vld [vmem:[#allocation9 + $0x1a8] sm:$0xff]
      %v980 = vld [vmem:[#allocation9 + $0x1b0] sm:$0xff]
      %v981 = vld [vmem:[#allocation9 + $0x1b8] sm:$0xff]
      %v982 = vld [vmem:[#allocation9 + $0x1c0] sm:$0xff]
      %v983 = vld [vmem:[#allocation9 + $0x1c8] sm:$0xff]
      %v984 = vld [vmem:[#allocation9 + $0x1d0] sm:$0xff]
      %v985 = vld [vmem:[#allocation9 + $0x1d8] sm:$0xff]
      %v986 = vld [vmem:[#allocation9 + $0x1e0] sm:$0xff]
      %v987 = vld [vmem:[#allocation9 + $0x1e8] sm:$0xff]
      %v988 = vld [vmem:[#allocation9 + $0x1f0] sm:$0xff]
      %v989 = vld [vmem:[#allocation9 + $0x1f8] sm:$0xff]
      %v990 = vld [vmem:[%s4] sm:$0x3]
      %v992 = vlaneseq
      %v993 = vshrl.u32 %v992, 7
      %v994 = vsub.s32 0, %v993
      %v995 = vrot.slane %v990, %v994
      %v996 = vlaneseq
      %v997 = vshrl.u32 %v996, 7
      %v998 = vsub.s32 1, %v997
      %v999 = vrot.slane %v990, %v998
      %v1066 = vunpack.c.l.b16 %v926
      %v1067 = vunpack.c.h.b16 %v926
      %v1068 = vunpack.c.l.b16 %v927
      %v1069 = vunpack.c.h.b16 %v927
      %v1070 = vunpack.c.l.b16 %v928
      %v1071 = vunpack.c.h.b16 %v928
      %v1072 = vunpack.c.l.b16 %v929
      %v1073 = vunpack.c.h.b16 %v929
      %v1074 = vunpack.c.l.b16 %v930
      %v1075 = vunpack.c.h.b16 %v930
      %v1076 = vunpack.c.l.b16 %v931
      %v1077 = vunpack.c.h.b16 %v931
      %v1078 = vunpack.c.l.b16 %v932
      %v1079 = vunpack.c.h.b16 %v932
      %v1080 = vunpack.c.l.b16 %v933
      %v1081 = vunpack.c.h.b16 %v933
      %v1082 = vunpack.c.l.b16 %v934
      %v1083 = vunpack.c.h.b16 %v934
      %v1084 = vunpack.c.l.b16 %v935
      %v1085 = vunpack.c.h.b16 %v935
      %v1086 = vunpack.c.l.b16 %v936
      %v1087 = vunpack.c.h.b16 %v936
      %v1088 = vunpack.c.l.b16 %v937
      %v1089 = vunpack.c.h.b16 %v937
      %v1090 = vunpack.c.l.b16 %v938
      %v1091 = vunpack.c.h.b16 %v938
      %v1092 = vunpack.c.l.b16 %v939
      %v1093 = vunpack.c.h.b16 %v939
      %v1094 = vunpack.c.l.b16 %v940
      %v1095 = vunpack.c.h.b16 %v940
      %v1096 = vunpack.c.l.b16 %v941
      %v1097 = vunpack.c.h.b16 %v941
      %v1098 = vunpack.c.l.b16 %v942
      %v1099 = vunpack.c.h.b16 %v942
      %v1100 = vunpack.c.l.b16 %v943
      %v1101 = vunpack.c.h.b16 %v943
      %v1102 = vunpack.c.l.b16 %v944
      %v1103 = vunpack.c.h.b16 %v944
      %v1104 = vunpack.c.l.b16 %v945
      %v1105 = vunpack.c.h.b16 %v945
      %v1106 = vunpack.c.l.b16 %v946
      %v1107 = vunpack.c.h.b16 %v946
      %v1108 = vunpack.c.l.b16 %v947
      %v1109 = vunpack.c.h.b16 %v947
      %v1110 = vunpack.c.l.b16 %v948
      %v1111 = vunpack.c.h.b16 %v948
      %v1112 = vunpack.c.l.b16 %v949
      %v1113 = vunpack.c.h.b16 %v949
      %v1114 = vunpack.c.l.b16 %v950
      %v1115 = vunpack.c.h.b16 %v950
      %v1116 = vunpack.c.l.b16 %v951
      %v1117 = vunpack.c.h.b16 %v951
      %v1118 = vunpack.c.l.b16 %v952
      %v1119 = vunpack.c.h.b16 %v952
      %v1120 = vunpack.c.l.b16 %v953
      %v1121 = vunpack.c.h.b16 %v953
      %v1122 = vunpack.c.l.b16 %v954
      %v1123 = vunpack.c.h.b16 %v954
      %v1124 = vunpack.c.l.b16 %v955
      %v1125 = vunpack.c.h.b16 %v955
      %v1126 = vunpack.c.l.b16 %v956
      %v1127 = vunpack.c.h.b16 %v956
      %v1128 = vunpack.c.l.b16 %v957
      %v1129 = vunpack.c.h.b16 %v957
      %v1130 = vunpack.c.l.b16 %v958
      %v1131 = vunpack.c.h.b16 %v958
      %v1132 = vunpack.c.l.b16 %v959
      %v1133 = vunpack.c.h.b16 %v959
      %v1134 = vunpack.c.l.b16 %v960
      %v1135 = vunpack.c.h.b16 %v960
      %v1136 = vunpack.c.l.b16 %v961
      %v1137 = vunpack.c.h.b16 %v961
      %v1138 = vunpack.c.l.b16 %v962
      %v1139 = vunpack.c.h.b16 %v962
      %v1140 = vunpack.c.l.b16 %v963
      %v1141 = vunpack.c.h.b16 %v963
      %v1142 = vunpack.c.l.b16 %v964
      %v1143 = vunpack.c.h.b16 %v964
      %v1144 = vunpack.c.l.b16 %v965
      %v1145 = vunpack.c.h.b16 %v965
      %v1146 = vunpack.c.l.b16 %v966
      %v1147 = vunpack.c.h.b16 %v966
      %v1148 = vunpack.c.l.b16 %v967
      %v1149 = vunpack.c.h.b16 %v967
      %v1150 = vunpack.c.l.b16 %v968
      %v1151 = vunpack.c.h.b16 %v968
      %v1152 = vunpack.c.l.b16 %v969
      %v1153 = vunpack.c.h.b16 %v969
      %v1154 = vunpack.c.l.b16 %v970
      %v1155 = vunpack.c.h.b16 %v970
      %v1156 = vunpack.c.l.b16 %v971
      %v1157 = vunpack.c.h.b16 %v971
      %v1158 = vunpack.c.l.b16 %v972
      %v1159 = vunpack.c.h.b16 %v972
      %v1160 = vunpack.c.l.b16 %v973
      %v1161 = vunpack.c.h.b16 %v973
      %v1162 = vunpack.c.l.b16 %v974
      %v1163 = vunpack.c.h.b16 %v974
      %v1164 = vunpack.c.l.b16 %v975
      %v1165 = vunpack.c.h.b16 %v975
      %v1166 = vunpack.c.l.b16 %v976
      %v1167 = vunpack.c.h.b16 %v976
      %v1168 = vunpack.c.l.b16 %v977
      %v1169 = vunpack.c.h.b16 %v977
      %v1170 = vunpack.c.l.b16 %v978
      %v1171 = vunpack.c.h.b16 %v978
      %v1172 = vunpack.c.l.b16 %v979
      %v1173 = vunpack.c.h.b16 %v979
      %v1174 = vunpack.c.l.b16 %v980
      %v1175 = vunpack.c.h.b16 %v980
      %v1176 = vunpack.c.l.b16 %v981
      %v1177 = vunpack.c.h.b16 %v981
      %v1178 = vunpack.c.l.b16 %v982
      %v1179 = vunpack.c.h.b16 %v982
      %v1180 = vunpack.c.l.b16 %v983
      %v1181 = vunpack.c.h.b16 %v983
      %v1182 = vunpack.c.l.b16 %v984
      %v1183 = vunpack.c.h.b16 %v984
      %v1184 = vunpack.c.l.b16 %v985
      %v1185 = vunpack.c.h.b16 %v985
      %v1186 = vunpack.c.l.b16 %v986
      %v1187 = vunpack.c.h.b16 %v986
      %v1188 = vunpack.c.l.b16 %v987
      %v1189 = vunpack.c.h.b16 %v987
      %v1190 = vunpack.c.l.b16 %v988
      %v1191 = vunpack.c.h.b16 %v988
      %v1192 = vunpack.c.l.b16 %v989
      %v1193 = vunpack.c.h.b16 %v989
      %v1194 = vpack.c.b16 %v1068, %v1066
      %v1195 = vpack.c.b16 %v1069, %v1067
      %v1196 = vpack.c.b16 %v1072, %v1070
      %v1197 = vpack.c.b16 %v1073, %v1071
      %v1198 = vpack.c.b16 %v1076, %v1074
      %v1199 = vpack.c.b16 %v1077, %v1075
      %v1200 = vpack.c.b16 %v1080, %v1078
      %v1201 = vpack.c.b16 %v1081, %v1079
      %v1202 = vpack.c.b16 %v1084, %v1082
      %v1203 = vpack.c.b16 %v1085, %v1083
      %v1204 = vpack.c.b16 %v1088, %v1086
      %v1205 = vpack.c.b16 %v1089, %v1087
      %v1206 = vpack.c.b16 %v1092, %v1090
      %v1207 = vpack.c.b16 %v1093, %v1091
      %v1208 = vpack.c.b16 %v1096, %v1094
      %v1209 = vpack.c.b16 %v1097, %v1095
      %v1210 = vpack.c.b16 %v1100, %v1098
      %v1211 = vpack.c.b16 %v1101, %v1099
      %v1212 = vpack.c.b16 %v1104, %v1102
      %v1213 = vpack.c.b16 %v1105, %v1103
      %v1214 = vpack.c.b16 %v1108, %v1106
      %v1215 = vpack.c.b16 %v1109, %v1107
      %v1216 = vpack.c.b16 %v1112, %v1110
      %v1217 = vpack.c.b16 %v1113, %v1111
      %v1218 = vpack.c.b16 %v1116, %v1114
      %v1219 = vpack.c.b16 %v1117, %v1115
      %v1220 = vpack.c.b16 %v1120, %v1118
      %v1221 = vpack.c.b16 %v1121, %v1119
      %v1222 = vpack.c.b16 %v1124, %v1122
      %v1223 = vpack.c.b16 %v1125, %v1123
      %v1224 = vpack.c.b16 %v1128, %v1126
      %v1225 = vpack.c.b16 %v1129, %v1127
      %v1226 = vpack.c.b16 %v1132, %v1130
      %v1227 = vpack.c.b16 %v1133, %v1131
      %v1228 = vpack.c.b16 %v1136, %v1134
      %v1229 = vpack.c.b16 %v1137, %v1135
      %v1230 = vpack.c.b16 %v1140, %v1138
      %v1231 = vpack.c.b16 %v1141, %v1139
      %v1232 = vpack.c.b16 %v1144, %v1142
      %v1233 = vpack.c.b16 %v1145, %v1143
      %v1234 = vpack.c.b16 %v1148, %v1146
      %v1235 = vpack.c.b16 %v1149, %v1147
      %v1236 = vpack.c.b16 %v1152, %v1150
      %v1237 = vpack.c.b16 %v1153, %v1151
      %v1238 = vpack.c.b16 %v1156, %v1154
      %v1239 = vpack.c.b16 %v1157, %v1155
      %v1240 = vpack.c.b16 %v1160, %v1158
      %v1241 = vpack.c.b16 %v1161, %v1159
      %v1242 = vpack.c.b16 %v1164, %v1162
      %v1243 = vpack.c.b16 %v1165, %v1163
      %v1244 = vpack.c.b16 %v1168, %v1166
      %v1245 = vpack.c.b16 %v1169, %v1167
      %v1246 = vpack.c.b16 %v1172, %v1170
      %v1247 = vpack.c.b16 %v1173, %v1171
      %v1248 = vpack.c.b16 %v1176, %v1174
      %v1249 = vpack.c.b16 %v1177, %v1175
      %v1250 = vpack.c.b16 %v1180, %v1178
      %v1251 = vpack.c.b16 %v1181, %v1179
      %v1252 = vpack.c.b16 %v1184, %v1182
      %v1253 = vpack.c.b16 %v1185, %v1183
      %v1254 = vpack.c.b16 %v1188, %v1186
      %v1255 = vpack.c.b16 %v1189, %v1187
      %v1256 = vpack.c.b16 %v1192, %v1190
      %v1257 = vpack.c.b16 %v1193, %v1191
      %1322 = vmatprep.subr.bf16.mxu0 %v1209
      %1323 = vmatpush1.bf16.msra.mxu0 %v1208
      %1324 = vmatprep.subr.bf16.mxu0 %v1207
      %1325 = vmatpush1.bf16.msra.mxu0 %v1206
      %1326 = vmatprep.subr.bf16.mxu0 %v1205
      %1327 = vmatpush1.bf16.msra.mxu0 %v1204
      %1328 = vmatprep.subr.bf16.mxu0 %v1203
      %1329 = vmatpush1.bf16.msra.mxu0 %v1202
      %1330 = vmatprep.subr.bf16.mxu0 %v1201
      %1331 = vmatpush1.bf16.msra.mxu0 %v1200
      %1332 = vmatprep.subr.bf16.mxu0 %v1199
      %1333 = vmatpush1.bf16.msra.mxu0 %v1198
      %1334 = vmatprep.subr.bf16.mxu0 %v1197
      %1335 = vmatpush1.bf16.msra.mxu0 %v1196
      %1336 = vmatprep.subr.bf16.mxu0 %v1195
      %1337 = vmatpush1.bf16.msra.mxu0 %v1194
      %1338 = vmatprep.subr.bf16.mxu0 %v1225
      %1339 = vmatpush2.bf16.msra.mxu0 %v1224
      %1340 = vmatprep.subr.bf16.mxu0 %v1223
      %1341 = vmatpush2.bf16.msra.mxu0 %v1222
      %1342 = vmatprep.subr.bf16.mxu0 %v1221
      %1343 = vmatpush2.bf16.msra.mxu0 %v1220
      %1344 = vmatprep.subr.bf16.mxu0 %v1219
      %1345 = vmatpush2.bf16.msra.mxu0 %v1218
      %1346 = vmatprep.subr.bf16.mxu0 %v1217
      %1347 = vmatpush2.bf16.msra.mxu0 %v1216
      %1348 = vmatprep.subr.bf16.mxu0 %v1215
      %1349 = vmatpush2.bf16.msra.mxu0 %v1214
      %1350 = vmatprep.subr.bf16.mxu0 %v1213
      %1351 = vmatpush2.bf16.msra.mxu0 %v1212
      %1352 = vmatprep.subr.bf16.mxu0 %v1211
      %1353 = vmatpush2.bf16.msra.mxu0 %v1210
      %1354 = vmatprep.mubr.bf16.mxu0 %v895
      %1355 = vmatmul.mubr.bf16.gmra.mxu0 %v894
      %v1356 = vpop.f32.mrf.mxu0
      %v1357 = vadd.f32 %v995, %v1356
      %v1358 = vpop.f32.mrf.mxu0
      %v1359 = vadd.f32 %v999, %v1358
      %v1360 = vpop.f32.mrf.mxu0
      %v1361 = vadd.f32 %v995, %v1360
      %v1362 = vpop.f32.mrf.mxu0
      %v1363 = vadd.f32 %v999, %v1362
      %1364 = vmatprep.mubr.bf16.mxu0 %v899
      %1365 = vmatmul.mubr.bf16.gmra.mxu0 %v898
      %v1366 = vpop.f32.mrf.mxu0
      %v1367 = vadd.f32 %v995, %v1366
      %v1368 = vpop.f32.mrf.mxu0
      %v1369 = vadd.f32 %v999, %v1368
      %v1370 = vpop.f32.mrf.mxu0
      %v1371 = vadd.f32 %v995, %v1370
      %v1372 = vpop.f32.mrf.mxu0
      %v1373 = vadd.f32 %v999, %v1372
      %1374 = vmatprep.mubr.bf16.mxu0 %v903
      %1375 = vmatmul.mubr.bf16.gmra.mxu0 %v902
      %v1376 = vpop.f32.mrf.mxu0
      %v1377 = vadd.f32 %v995, %v1376
      %v1378 = vpop.f32.mrf.mxu0
      %v1379 = vadd.f32 %v999, %v1378
      %v1380 = vpop.f32.mrf.mxu0
      %v1381 = vadd.f32 %v995, %v1380
      %v1382 = vpop.f32.mrf.mxu0
      %v1383 = vadd.f32 %v999, %v1382
      %1384 = vmatprep.mubr.bf16.mxu0 %v907
      %1385 = vmatmul.mubr.bf16.gmra.mxu0 %v906
      %v1386 = vpop.f32.mrf.mxu0
      %v1387 = vadd.f32 %v995, %v1386
      %v1388 = vpop.f32.mrf.mxu0
      %v1389 = vadd.f32 %v999, %v1388
      %v1390 = vpop.f32.mrf.mxu0
      %v1391 = vadd.f32 %v995, %v1390
      %v1392 = vpop.f32.mrf.mxu0
      %v1393 = vadd.f32 %v999, %v1392
      %1394 = vmatprep.mubr.bf16.mxu0 %v911
      %1395 = vmatmul.mubr.bf16.gmra.mxu0 %v910
      %v1396 = vpop.f32.mrf.mxu0
      %v1397 = vadd.f32 %v995, %v1396
      %v1398 = vpop.f32.mrf.mxu0
      %v1399 = vadd.f32 %v999, %v1398
      %v1400 = vpop.f32.mrf.mxu0
      %v1401 = vadd.f32 %v995, %v1400
      %v1402 = vpop.f32.mrf.mxu0
      %v1403 = vadd.f32 %v999, %v1402
      %1404 = vmatprep.mubr.bf16.mxu0 %v915
      %1405 = vmatmul.mubr.bf16.gmra.mxu0 %v914
      %v1406 = vpop.f32.mrf.mxu0
      %v1407 = vadd.f32 %v995, %v1406
      %v1408 = vpop.f32.mrf.mxu0
      %v1409 = vadd.f32 %v999, %v1408
      %v1410 = vpop.f32.mrf.mxu0
      %v1411 = vadd.f32 %v995, %v1410
      %v1412 = vpop.f32.mrf.mxu0
      %v1413 = vadd.f32 %v999, %v1412
      %1414 = vmatprep.mubr.bf16.mxu0 %v919
      %1415 = vmatmul.mubr.bf16.gmra.mxu0 %v918
      %v1416 = vpop.f32.mrf.mxu0
      %v1417 = vadd.f32 %v995, %v1416
      %v1418 = vpop.f32.mrf.mxu0
      %v1419 = vadd.f32 %v999, %v1418
      %v1420 = vpop.f32.mrf.mxu0
      %v1421 = vadd.f32 %v995, %v1420
      %v1422 = vpop.f32.mrf.mxu0
      %v1423 = vadd.f32 %v999, %v1422
      %1424 = vmatprep.mubr.bf16.mxu0 %v923
      %1425 = vmatmul.mubr.bf16.gmra.mxu0 %v922
      %v1426 = vpop.f32.mrf.mxu0
      %v1427 = vadd.f32 %v995, %v1426
      %v1428 = vpop.f32.mrf.mxu0
      %v1429 = vadd.f32 %v999, %v1428
      %v1430 = vpop.f32.mrf.mxu0
      %v1431 = vadd.f32 %v995, %v1430
      %v1432 = vpop.f32.mrf.mxu0
      %v1433 = vadd.f32 %v999, %v1432
      %1434 = vdwg.mxu0
      %1435 = vmatprep.subr.bf16.mxu0 %v1241
      %1436 = vmatpush1.bf16.msra.mxu0 %v1240
      %1437 = vmatprep.subr.bf16.mxu0 %v1239
      %1438 = vmatpush1.bf16.msra.mxu0 %v1238
      %1439 = vmatprep.subr.bf16.mxu0 %v1237
      %1440 = vmatpush1.bf16.msra.mxu0 %v1236
      %1441 = vmatprep.subr.bf16.mxu0 %v1235
      %1442 = vmatpush1.bf16.msra.mxu0 %v1234
      %1443 = vmatprep.subr.bf16.mxu0 %v1233
      %1444 = vmatpush1.bf16.msra.mxu0 %v1232
      %1445 = vmatprep.subr.bf16.mxu0 %v1231
      %1446 = vmatpush1.bf16.msra.mxu0 %v1230
      %1447 = vmatprep.subr.bf16.mxu0 %v1229
      %1448 = vmatpush1.bf16.msra.mxu0 %v1228
      %1449 = vmatprep.subr.bf16.mxu0 %v1227
      %1450 = vmatpush1.bf16.msra.mxu0 %v1226
      %1451 = vmatprep.subr.bf16.mxu0 %v1257
      %1452 = vmatpush2.bf16.msra.mxu0 %v1256
      %1453 = vmatprep.subr.bf16.mxu0 %v1255
      %1454 = vmatpush2.bf16.msra.mxu0 %v1254
      %1455 = vmatprep.subr.bf16.mxu0 %v1253
      %1456 = vmatpush2.bf16.msra.mxu0 %v1252
      %1457 = vmatprep.subr.bf16.mxu0 %v1251
      %1458 = vmatpush2.bf16.msra.mxu0 %v1250
      %1459 = vmatprep.subr.bf16.mxu0 %v1249
      %1460 = vmatpush2.bf16.msra.mxu0 %v1248
      %1461 = vmatprep.subr.bf16.mxu0 %v1247
      %1462 = vmatpush2.bf16.msra.mxu0 %v1246
      %1463 = vmatprep.subr.bf16.mxu0 %v1245
      %1464 = vmatpush2.bf16.msra.mxu0 %v1244
      %1465 = vmatprep.subr.bf16.mxu0 %v1243
      %1466 = vmatpush2.bf16.msra.mxu0 %v1242
      %1467 = vmatprep.mubr.bf16.mxu0 %v897
      %1468 = vmatmul.mubr.bf16.gmra.mxu0 %v896
      %v1469 = vpop.f32.mrf.mxu0
      %v1470 = vadd.f32 %v1357, %v1469
      %v1471 = vpop.f32.mrf.mxu0
      %v1472 = vadd.f32 %v1359, %v1471
      %v1473 = vpop.f32.mrf.mxu0
      %v1474 = vadd.f32 %v1361, %v1473
      %v1475 = vpop.f32.mrf.mxu0
      %v1476 = vadd.f32 %v1363, %v1475
      %1477 = vmatprep.mubr.bf16.mxu0 %v901
      %1478 = vmatmul.mubr.bf16.gmra.mxu0 %v900
      %v1479 = vpop.f32.mrf.mxu0
      %v1480 = vadd.f32 %v1367, %v1479
      %v1481 = vpop.f32.mrf.mxu0
      %v1482 = vadd.f32 %v1369, %v1481
      %v1483 = vpop.f32.mrf.mxu0
      %v1484 = vadd.f32 %v1371, %v1483
      %v1485 = vpop.f32.mrf.mxu0
      %v1486 = vadd.f32 %v1373, %v1485
      %1487 = vmatprep.mubr.bf16.mxu0 %v905
      %1488 = vmatmul.mubr.bf16.gmra.mxu0 %v904
      %v1489 = vpop.f32.mrf.mxu0
      %v1490 = vadd.f32 %v1377, %v1489
      %v1491 = vpop.f32.mrf.mxu0
      %v1492 = vadd.f32 %v1379, %v1491
      %v1493 = vpop.f32.mrf.mxu0
      %v1494 = vadd.f32 %v1381, %v1493
      %v1495 = vpop.f32.mrf.mxu0
      %v1496 = vadd.f32 %v1383, %v1495
      %1497 = vmatprep.mubr.bf16.mxu0 %v909
      %1498 = vmatmul.mubr.bf16.gmra.mxu0 %v908
      %v1499 = vpop.f32.mrf.mxu0
      %v1500 = vadd.f32 %v1387, %v1499
      %v1501 = vpop.f32.mrf.mxu0
      %v1502 = vadd.f32 %v1389, %v1501
      %v1503 = vpop.f32.mrf.mxu0
      %v1504 = vadd.f32 %v1391, %v1503
      %v1505 = vpop.f32.mrf.mxu0
      %v1506 = vadd.f32 %v1393, %v1505
      %1507 = vmatprep.mubr.bf16.mxu0 %v913
      %1508 = vmatmul.mubr.bf16.gmra.mxu0 %v912
      %v1509 = vpop.f32.mrf.mxu0
      %v1510 = vadd.f32 %v1397, %v1509
      %v1511 = vpop.f32.mrf.mxu0
      %v1512 = vadd.f32 %v1399, %v1511
      %v1513 = vpop.f32.mrf.mxu0
      %v1514 = vadd.f32 %v1401, %v1513
      %v1515 = vpop.f32.mrf.mxu0
      %v1516 = vadd.f32 %v1403, %v1515
      %1517 = vmatprep.mubr.bf16.mxu0 %v917
      %1518 = vmatmul.mubr.bf16.gmra.mxu0 %v916
      %v1519 = vpop.f32.mrf.mxu0
      %v1520 = vadd.f32 %v1407, %v1519
      %v1521 = vpop.f32.mrf.mxu0
      %v1522 = vadd.f32 %v1409, %v1521
      %v1523 = vpop.f32.mrf.mxu0
      %v1524 = vadd.f32 %v1411, %v1523
      %v1525 = vpop.f32.mrf.mxu0
      %v1526 = vadd.f32 %v1413, %v1525
      %1527 = vmatprep.mubr.bf16.mxu0 %v921
      %1528 = vmatmul.mubr.bf16.gmra.mxu0 %v920
      %v1529 = vpop.f32.mrf.mxu0
      %v1530 = vadd.f32 %v1417, %v1529
      %v1531 = vpop.f32.mrf.mxu0
      %v1532 = vadd.f32 %v1419, %v1531
      %v1533 = vpop.f32.mrf.mxu0
      %v1534 = vadd.f32 %v1421, %v1533
      %v1535 = vpop.f32.mrf.mxu0
      %v1536 = vadd.f32 %v1423, %v1535
      %1537 = vmatprep.mubr.bf16.mxu0 %v925
      %1538 = vmatmul.mubr.bf16.gmra.mxu0 %v924
      %v1539 = vpop.f32.mrf.mxu0
      %v1540 = vadd.f32 %v1427, %v1539
      %v1541 = vpop.f32.mrf.mxu0
      %v1542 = vadd.f32 %v1429, %v1541
      %v1543 = vpop.f32.mrf.mxu0
      %v1544 = vadd.f32 %v1431, %v1543
      %v1545 = vpop.f32.mrf.mxu0
      %v1546 = vadd.f32 %v1433, %v1545
      %1547 = vdwg.mxu0
      %v1548 = vmax.f32 %v1470, 0.0
      %v1549 = vmax.f32 %v1472, 0.0
      %v1550 = vmax.f32 %v1474, 0.0
      %v1551 = vmax.f32 %v1476, 0.0
      %v1552 = vmax.f32 %v1480, 0.0
      %v1553 = vmax.f32 %v1482, 0.0
      %v1554 = vmax.f32 %v1484, 0.0
      %v1555 = vmax.f32 %v1486, 0.0
      %v1556 = vmax.f32 %v1490, 0.0
      %v1557 = vmax.f32 %v1492, 0.0
      %v1558 = vmax.f32 %v1494, 0.0
      %v1559 = vmax.f32 %v1496, 0.0
      %v1560 = vmax.f32 %v1500, 0.0
      %v1561 = vmax.f32 %v1502, 0.0
      %v1562 = vmax.f32 %v1504, 0.0
      %v1563 = vmax.f32 %v1506, 0.0
      %v1564 = vmax.f32 %v1510, 0.0
      %v1565 = vmax.f32 %v1512, 0.0
      %v1566 = vmax.f32 %v1514, 0.0
      %v1567 = vmax.f32 %v1516, 0.0
      %v1568 = vmax.f32 %v1520, 0.0
      %v1569 = vmax.f32 %v1522, 0.0
      %v1570 = vmax.f32 %v1524, 0.0
      %v1571 = vmax.f32 %v1526, 0.0
      %v1572 = vmax.f32 %v1530, 0.0
      %v1573 = vmax.f32 %v1532, 0.0
      %v1574 = vmax.f32 %v1534, 0.0
      %v1575 = vmax.f32 %v1536, 0.0
      %v1576 = vmax.f32 %v1540, 0.0
      %v1577 = vmax.f32 %v1542, 0.0
      %v1578 = vmax.f32 %v1544, 0.0
      %v1579 = vmax.f32 %v1546, 0.0
      %v1580 = vpack.c.bf16 %v1550, %v1548
      %v1581 = vpack.c.bf16 %v1551, %v1549
      %v1582 = vpack.c.bf16 %v1554, %v1552
      %v1583 = vpack.c.bf16 %v1555, %v1553
      %v1584 = vpack.c.bf16 %v1558, %v1556
      %v1585 = vpack.c.bf16 %v1559, %v1557
      %v1586 = vpack.c.bf16 %v1562, %v1560
      %v1587 = vpack.c.bf16 %v1563, %v1561
      %v1588 = vpack.c.bf16 %v1566, %v1564
      %v1589 = vpack.c.bf16 %v1567, %v1565
      %v1590 = vpack.c.bf16 %v1570, %v1568
      %v1591 = vpack.c.bf16 %v1571, %v1569
      %v1592 = vpack.c.bf16 %v1574, %v1572
      %v1593 = vpack.c.bf16 %v1575, %v1573
      %v1594 = vpack.c.bf16 %v1578, %v1576
      %v1595 = vpack.c.bf16 %v1579, %v1577
      %v1596 = vld [vmem:[#allocation11] sm:$0xf]
      %v1597 = vld [vmem:[#allocation11 + $0x4] sm:$0xf]
      %v1598 = vld [vmem:[#allocation11 + $0x8] sm:$0xf]
      %v1599 = vld [vmem:[#allocation11 + $0xc] sm:$0xf]
      %v1600 = vld [vmem:[#allocation11 + $0x10] sm:$0xf]
      %v1601 = vld [vmem:[#allocation11 + $0x14] sm:$0xf]
      %v1602 = vld [vmem:[#allocation11 + $0x18] sm:$0xf]
      %v1603 = vld [vmem:[#allocation11 + $0x1c] sm:$0xf]
      %v1604 = vld [vmem:[#allocation11 + $0x20] sm:$0xf]
      %v1605 = vld [vmem:[#allocation11 + $0x24] sm:$0xf]
      %v1606 = vld [vmem:[#allocation11 + $0x28] sm:$0xf]
      %v1607 = vld [vmem:[#allocation11 + $0x2c] sm:$0xf]
      %v1608 = vld [vmem:[#allocation11 + $0x30] sm:$0xf]
      %v1609 = vld [vmem:[#allocation11 + $0x34] sm:$0xf]
      %v1610 = vld [vmem:[#allocation11 + $0x38] sm:$0xf]
      %v1611 = vld [vmem:[#allocation11 + $0x3c] sm:$0xf]
      %v1612 = vld [vmem:[#allocation11 + $0x40] sm:$0xf]
      %v1613 = vld [vmem:[#allocation11 + $0x44] sm:$0xf]
      %v1614 = vld [vmem:[#allocation11 + $0x48] sm:$0xf]
      %v1615 = vld [vmem:[#allocation11 + $0x4c] sm:$0xf]
      %v1616 = vld [vmem:[#allocation11 + $0x50] sm:$0xf]
      %v1617 = vld [vmem:[#allocation11 + $0x54] sm:$0xf]
      %v1618 = vld [vmem:[#allocation11 + $0x58] sm:$0xf]
      %v1619 = vld [vmem:[#allocation11 + $0x5c] sm:$0xf]
      %v1620 = vld [vmem:[#allocation11 + $0x60] sm:$0xf]
      %v1621 = vld [vmem:[#allocation11 + $0x64] sm:$0xf]
      %v1622 = vld [vmem:[#allocation11 + $0x68] sm:$0xf]
      %v1623 = vld [vmem:[#allocation11 + $0x6c] sm:$0xf]
      %v1624 = vld [vmem:[#allocation11 + $0x70] sm:$0xf]
      %v1625 = vld [vmem:[#allocation11 + $0x74] sm:$0xf]
      %v1626 = vld [vmem:[#allocation11 + $0x78] sm:$0xf]
      %v1627 = vld [vmem:[#allocation11 + $0x7c] sm:$0xf]
      %v1628 = vld [vmem:[%s6] sm:$0x1]
      %v1630 = vlaneseq
      %v1631 = vshrl.u32 %v1630, 7
      %v1632 = vsub.s32 0, %v1631
      %v1633 = vrot.slane %v1628, %v1632
      %v1667 = vunpack.c.l.b16 %v1596
      %v1668 = vunpack.c.l.b16 %v1597
      %v1669 = vunpack.c.l.b16 %v1598
      %v1670 = vunpack.c.l.b16 %v1599
      %v1671 = vunpack.c.l.b16 %v1600
      %v1672 = vunpack.c.l.b16 %v1601
      %v1673 = vunpack.c.l.b16 %v1602
      %v1674 = vunpack.c.l.b16 %v1603
      %v1675 = vunpack.c.l.b16 %v1604
      %v1676 = vunpack.c.l.b16 %v1605
      %v1677 = vunpack.c.l.b16 %v1606
      %v1678 = vunpack.c.l.b16 %v1607
      %v1679 = vunpack.c.l.b16 %v1608
      %v1680 = vunpack.c.l.b16 %v1609
      %v1681 = vunpack.c.l.b16 %v1610
      %v1682 = vunpack.c.l.b16 %v1611
      %v1683 = vunpack.c.l.b16 %v1612
      %v1684 = vunpack.c.l.b16 %v1613
      %v1685 = vunpack.c.l.b16 %v1614
      %v1686 = vunpack.c.l.b16 %v1615
      %v1687 = vunpack.c.l.b16 %v1616
      %v1688 = vunpack.c.l.b16 %v1617
      %v1689 = vunpack.c.l.b16 %v1618
      %v1690 = vunpack.c.l.b16 %v1619
      %v1691 = vunpack.c.l.b16 %v1620
      %v1692 = vunpack.c.l.b16 %v1621
      %v1693 = vunpack.c.l.b16 %v1622
      %v1694 = vunpack.c.l.b16 %v1623
      %v1695 = vunpack.c.l.b16 %v1624
      %v1696 = vunpack.c.l.b16 %v1625
      %v1697 = vunpack.c.l.b16 %v1626
      %v1698 = vunpack.c.l.b16 %v1627
      %v1699 = vpack.c.b16 %v1668, %v1667
      %v1700 = vpack.c.b16 %v1670, %v1669
      %v1701 = vpack.c.b16 %v1672, %v1671
      %v1702 = vpack.c.b16 %v1674, %v1673
      %v1703 = vpack.c.b16 %v1676, %v1675
      %v1704 = vpack.c.b16 %v1678, %v1677
      %v1705 = vpack.c.b16 %v1680, %v1679
      %v1706 = vpack.c.b16 %v1682, %v1681
      %v1707 = vpack.c.b16 %v1684, %v1683
      %v1708 = vpack.c.b16 %v1686, %v1685
      %v1709 = vpack.c.b16 %v1688, %v1687
      %v1710 = vpack.c.b16 %v1690, %v1689
      %v1711 = vpack.c.b16 %v1692, %v1691
      %v1712 = vpack.c.b16 %v1694, %v1693
      %v1713 = vpack.c.b16 %v1696, %v1695
      %v1714 = vpack.c.b16 %v1698, %v1697
      %1731 = vmatprep.subr.bf16.mxu0 0
      %1732 = vmatpush1.bf16.msra.mxu0 %v1706
      %1733 = vmatprep.subr.bf16.mxu0 0
      %1734 = vmatpush1.bf16.msra.mxu0 %v1705
      %1735 = vmatprep.subr.bf16.mxu0 0
      %1736 = vmatpush1.bf16.msra.mxu0 %v1704
      %1737 = vmatprep.subr.bf16.mxu0 0
      %1738 = vmatpush1.bf16.msra.mxu0 %v1703
      %1739 = vmatprep.subr.bf16.mxu0 0
      %1740 = vmatpush1.bf16.msra.mxu0 %v1702
      %1741 = vmatprep.subr.bf16.mxu0 0
      %1742 = vmatpush1.bf16.msra.mxu0 %v1701
      %1743 = vmatprep.subr.bf16.mxu0 0
      %1744 = vmatpush1.bf16.msra.mxu0 %v1700
      %1745 = vmatprep.subr.bf16.mxu0 0
      %1746 = vmatpush1.bf16.msra.mxu0 %v1699
      %1747 = vmatprep.subr.bf16.mxu0 0
      %1748 = vmatpush2.bf16.msra.mxu0 %v1714
      %1749 = vmatprep.subr.bf16.mxu0 0
      %1750 = vmatpush2.bf16.msra.mxu0 %v1713
      %1751 = vmatprep.subr.bf16.mxu0 0
      %1752 = vmatpush2.bf16.msra.mxu0 %v1712
      %1753 = vmatprep.subr.bf16.mxu0 0
      %1754 = vmatpush2.bf16.msra.mxu0 %v1711
      %1755 = vmatprep.subr.bf16.mxu0 0
      %1756 = vmatpush2.bf16.msra.mxu0 %v1710
      %1757 = vmatprep.subr.bf16.mxu0 0
      %1758 = vmatpush2.bf16.msra.mxu0 %v1709
      %1759 = vmatprep.subr.bf16.mxu0 0
      %1760 = vmatpush2.bf16.msra.mxu0 %v1708
      %1761 = vmatprep.subr.bf16.mxu0 0
      %1762 = vmatpush2.bf16.msra.mxu0 %v1707
      %1763 = vmatprep.mubr.bf16.mxu0 %v1581
      %1764 = vmatmul.mubr.bf16.gmra.mxu0 %v1580
      %v1765 = vpop.f32.mrf.mxu0
      %v1766 = vadd.f32 %v1633, %v1765
      %v1767 = vpop.f32.mrf.mxu0
      %v1768 = vpop.f32.mrf.mxu0
      %v1769 = vadd.f32 %v1633, %v1768
      %v1770 = vpop.f32.mrf.mxu0
      %1771 = vmatprep.mubr.bf16.mxu0 %v1583
      %1772 = vmatmul.mubr.bf16.gmra.mxu0 %v1582
      %v1773 = vpop.f32.mrf.mxu0
      %v1774 = vadd.f32 %v1633, %v1773
      %v1775 = vpop.f32.mrf.mxu0
      %v1776 = vpop.f32.mrf.mxu0
      %v1777 = vadd.f32 %v1633, %v1776
      %v1778 = vpop.f32.mrf.mxu0
      %1779 = vmatprep.mubr.bf16.mxu0 %v1585
      %1780 = vmatmul.mubr.bf16.gmra.mxu0 %v1584
      %v1781 = vpop.f32.mrf.mxu0
      %v1782 = vadd.f32 %v1633, %v1781
      %v1783 = vpop.f32.mrf.mxu0
      %v1784 = vpop.f32.mrf.mxu0
      %v1785 = vadd.f32 %v1633, %v1784
      %v1786 = vpop.f32.mrf.mxu0
      %1787 = vmatprep.mubr.bf16.mxu0 %v1587
      %1788 = vmatmul.mubr.bf16.gmra.mxu0 %v1586
      %v1789 = vpop.f32.mrf.mxu0
      %v1790 = vadd.f32 %v1633, %v1789
      %v1791 = vpop.f32.mrf.mxu0
      %v1792 = vpop.f32.mrf.mxu0
      %v1793 = vadd.f32 %v1633, %v1792
      %v1794 = vpop.f32.mrf.mxu0
      %1795 = vmatprep.mubr.bf16.mxu0 %v1589
      %1796 = vmatmul.mubr.bf16.gmra.mxu0 %v1588
      %v1797 = vpop.f32.mrf.mxu0
      %v1798 = vadd.f32 %v1633, %v1797
      %v1799 = vpop.f32.mrf.mxu0
      %v1800 = vpop.f32.mrf.mxu0
      %v1801 = vadd.f32 %v1633, %v1800
      %v1802 = vpop.f32.mrf.mxu0
      %1803 = vmatprep.mubr.bf16.mxu0 %v1591
      %1804 = vmatmul.mubr.bf16.gmra.mxu0 %v1590
      %v1805 = vpop.f32.mrf.mxu0
      %v1806 = vadd.f32 %v1633, %v1805
      %v1807 = vpop.f32.mrf.mxu0
      %v1808 = vpop.f32.mrf.mxu0
      %v1809 = vadd.f32 %v1633, %v1808
      %v1810 = vpop.f32.mrf.mxu0
      %1811 = vmatprep.mubr.bf16.mxu0 %v1593
      %1812 = vmatmul.mubr.bf16.gmra.mxu0 %v1592
      %v1813 = vpop.f32.mrf.mxu0
      %v1814 = vadd.f32 %v1633, %v1813
      %v1815 = vpop.f32.mrf.mxu0
      %v1816 = vpop.f32.mrf.mxu0
      %v1817 = vadd.f32 %v1633, %v1816
      %v1818 = vpop.f32.mrf.mxu0
      %1819 = vmatprep.mubr.bf16.mxu0 %v1595
      %1820 = vmatmul.mubr.bf16.gmra.mxu0 %v1594
      %v1821 = vpop.f32.mrf.mxu0
      %v1822 = vadd.f32 %v1633, %v1821
      %v1823 = vpop.f32.mrf.mxu0
      %v1824 = vpop.f32.mrf.mxu0
      %v1825 = vadd.f32 %v1633, %v1824
      %v1826 = vpop.f32.mrf.mxu0
      %1827 = vdwg.mxu0
      %1828 = vst [vmem:[#allocation12] sm:$0xff] %v1766
      %1829 = vst [vmem:[#allocation12 + $0x8] sm:$0xff] %v1769
      %1830 = vst [vmem:[#allocation12 + $0x10] sm:$0xff] %v1774
      %1831 = vst [vmem:[#allocation12 + $0x18] sm:$0xff] %v1777
      %1832 = vst [vmem:[#allocation12 + $0x20] sm:$0xff] %v1782
      %1833 = vst [vmem:[#allocation12 + $0x28] sm:$0xff] %v1785
      %1834 = vst [vmem:[#allocation12 + $0x30] sm:$0xff] %v1790
      %1835 = vst [vmem:[#allocation12 + $0x38] sm:$0xff] %v1793
      %1836 = vst [vmem:[#allocation12 + $0x40] sm:$0xff] %v1798
      %1837 = vst [vmem:[#allocation12 + $0x48] sm:$0xff] %v1801
      %1838 = vst [vmem:[#allocation12 + $0x50] sm:$0xff] %v1806
      %1839 = vst [vmem:[#allocation12 + $0x58] sm:$0xff] %v1809
      %1840 = vst [vmem:[#allocation12 + $0x60] sm:$0xff] %v1814
      %1841 = vst [vmem:[#allocation12 + $0x68] sm:$0xff] %v1817
      %1842 = vst [vmem:[#allocation12 + $0x70] sm:$0xff] %v1822
      %1843 = vst [vmem:[#allocation12 + $0x78] sm:$0xff] %v1825
    $region57: #{tpu_custom_call.1} parent=1 // pred_fallthru
      _
    // Predicated region
    $region58: #{tpu_custom_call.1} parent=1 // pred_check
      _
    $region59: #{tpu_custom_call.1} parent=1 // pred_check_branch
      %1845 = sbr.rel (0) target = $region61
    $region60: #{tpu_custom_call.1} parent=1 // pred_region
      %s1847 = ssub.s32 2048, 32
      %1848 = vsyncadd [#allocation5], %s1847
      %s1849 = sshll.u32 [#allocation12], 4
      %s1850 = int_to_ptr.vmem [resolvable:$true] %s1849
      %1855 = dma.vmem_to_hbm [thread:$0]  %s1850, 32, %s7, [#allocation5], 32, 32, 2
    $region61: #{tpu_custom_call.1} parent=1 // pred_fallthru
      _
    // Predicated region
    $region62: #{tpu_custom_call.1} parent=1 // pred_check
      _
    $region63: #{tpu_custom_call.1} parent=1 // pred_check_branch
      %1857 = sbr.rel (0) target = $region65
    $region64: #{tpu_custom_call.1} parent=1 // pred_region
      %1858 = dma.done [#allocation5], 2048
    $region65: #{tpu_custom_call.1} parent=1 // pred_fallthru
      _
    %1859 = vsyncpa [#allocation4], 1
    %1860 = vsyncpa [#allocation7], 1
    %1861 = vsyncpa [#allocation10], 1
    %1862 = vsyncpa [#allocation5], 1

</llo_original>
